<compile_context>
chip_gen: v7x
topology: tpu7x:2x2x1
jax: 0.10.0
libtpu: 0.0.40
codegen_flags: <defaults>
</compile_context>

<pallas_src>
import functools
import math

import jax
import jax.numpy as jnp
from jax.experimental import pallas as pl
from jax.experimental.pallas import tpu as pltpu

# ---- module hyper-parameters (synthetic, deterministic init) ----
CODEBOOK_SIZE = 128
EMB_DIM = 32
NUM_HIDDENS = 32
KL_WEIGHT = 0.0005
TEMP_INIT = 1.0  # tau; cancels out of the hard (eval-mode) forward value


def _gumbel_quant_kernel(seed_ref,          # SMEM, (1,) int32   (scalar prefetch)
                         x_ref,             # (C, TP)  bf16      pixels on lanes
                         wproj_ref,         # (K, C)   bf16
                         bproj_ref,         # (K, 1)   f32
                         embed_ref,         # (D, K)   f32  (embedding weight, transposed)
                         zq_ref,            # (D, TP)  f32
                         idx_ref,           # (1, TP)  int32
                         kl_ref):           # (1, TP)  f32
    # 1x1 conv == dense projection, pixels on the lane axis (MXU, f32 accumulate).
    logits = jnp.dot(wproj_ref[...], x_ref[...], preferred_element_type=jnp.float32)
    logits = logits + bproj_ref[...]                       # (K, TP) + (K, 1)

    K, TP = logits.shape
    row = jax.lax.broadcasted_iota(jnp.int32, (K, TP), 0)
    lane = jax.lax.broadcasted_iota(jnp.int32, (K, TP), 1)

    # Shared softmax pieces (used by both the sampling race and the KL term).
    m = jnp.max(logits, axis=0, keepdims=True)
    l = logits - m
    el = jnp.exp(l)                                        # 1 EUP exp / element

    # ---- counter-based uniform hash (pure VPU ops; runs on TPU and interpret) ----
    pix = pl.program_id(0) * (pl.num_programs(1) * TP) + pl.program_id(1) * TP + lane
    ctr = pix.astype(jnp.uint32) * jnp.uint32(K) + row.astype(jnp.uint32)
    h = ctr + seed_ref[0].astype(jnp.uint32) * jnp.uint32(0x9E3779B9)
    h = (h ^ (h >> 16)) * jnp.uint32(0x7FEB352D)           # lowbias32 finalizer
    h = (h ^ (h >> 15)) * jnp.uint32(0x846CA68B)
    h = h ^ (h >> 16)
    mant = (h >> 9) | jnp.uint32(0x3F800000)               # mantissa trick: [1, 2)
    u = jax.lax.bitcast_convert_type(mant, jnp.float32) - 1.0
    u = jnp.maximum(u, 1e-12)

    # ---- exponential-race gumbel-max: argmax(el / E) == argmax(logits + Gumbel) ----
    e = -jnp.log(u)                                        # 1 EUP log / element
    race = el / e
    mx = jnp.max(race, axis=0, keepdims=True)
    idx = jnp.min(jnp.where(race == mx, row, K), axis=0, keepdims=True)  # first max
    one_hot = (row == idx).astype(jnp.float32)             # (K, TP)

    # ---- z_q = embed^T @ one_hot: exact row gather on the MXU, lane-dense store ----
    zq_ref[...] = jnp.dot(embed_ref[...], one_hot,
                          preferred_element_type=jnp.float32).astype(zq_ref.dtype)
    idx_ref[...] = idx

    # ---- per-pixel KL-to-uniform, logsumexp form:
    #      sum_k qy*log(qy*K) = sum(el*l)/S - log(S) + log(K),  S = sum(el)
    s = jnp.sum(el, axis=0, keepdims=True)
    kl = jnp.sum(el * l, axis=0, keepdims=True) / s - jnp.log(s) + math.log(K)
    kl_ref[...] = kl.astype(kl_ref.dtype)


def _choose_pixel_tile(hw, batch, max_tp):
    """Pixel tile: multiple of 128, <= max_tp, >= 2 parallel grid steps when possible."""
    hw128 = max(128, -(-hw // 128) * 128)
    tp = max(128, (min(hw128, max_tp) // 128) * 128)
    # v7x has 2 TensorCores; keep at least 2 parallel grid steps if the image allows.
    if batch * (-(-hw128 // tp)) < 2 and hw128 > 128:
        tp = max(128, ((hw128 // 2) // 128) * 128)
    return tp


@functools.partial(jax.jit, static_argnames=("max_tp",))
def gumbel_quantizer_forward(z_nchw, w_proj, b_proj, embed_w, seed, *, max_tp=2048):
    """z_nchw: (B, num_hiddens, H, W).
    w_proj: (codebook_size, num_hiddens)  (1x1 conv weight), b_proj: (codebook_size,)
    embed_w: (codebook_size, emb_dim)     (nn.Embedding weight)
    Returns (z_q (B, emb_dim, H, W), diff, {'min_encoding_indices': (B, H, W)})."""
    B, C, H, W = z_nchw.shape
    K, Cw = w_proj.shape
    D = embed_w.shape[1]
    assert Cw == C and embed_w.shape[0] == K
    HW = H * W

    TP = _choose_pixel_tile(HW, B, max_tp)
    n_tiles = -(-HW // TP)
    HW_pad = n_tiles * TP

    # Pure reshapes / tiny constant transposes only -- no full-tensor HBM transpose.
    x = z_nchw.reshape(B, C, HW)
    if HW_pad != HW:
        x = jnp.pad(x, ((0, 0), (0, 0), (0, HW_pad - HW)))
    x = x.astype(jnp.bfloat16)                              # halves the x HBM stream
    w2 = w_proj.astype(jnp.bfloat16)
    b2 = b_proj.reshape(K, 1).astype(jnp.float32)
    embed_t = embed_w.T.astype(jnp.float32)                 # (D, K), exact z_q rows
    seed_arr = jnp.asarray(seed, dtype=jnp.int32).reshape((1,))

    grid = (B, n_tiles)

    zq, idx, kl = pl.pallas_call(
        _gumbel_quant_kernel,
        out_shape=(
            jax.ShapeDtypeStruct((B, D, HW_pad), jnp.float32),
            jax.ShapeDtypeStruct((B, 1, HW_pad), jnp.int32),
            jax.ShapeDtypeStruct((B, 1, HW_pad), jnp.float32),
        ),
        grid_spec=pltpu.PrefetchScalarGridSpec(
            num_scalar_prefetch=1,               # seed -> SMEM
            grid=grid,
            in_specs=[
                pl.BlockSpec((None, C, TP), lambda b, i, seed: (b, 0, i)),  # x
                pl.BlockSpec((K, C), lambda b, i, seed: (0, 0)),            # W_proj
                pl.BlockSpec((K, 1), lambda b, i, seed: (0, 0)),            # b_proj
                pl.BlockSpec((D, K), lambda b, i, seed: (0, 0)),            # embed^T
            ],
            out_specs=[
                pl.BlockSpec((None, D, TP), lambda b, i, seed: (b, 0, i)),  # z_q
                pl.BlockSpec((None, 1, TP), lambda b, i, seed: (b, 0, i)),  # indices
                pl.BlockSpec((None, 1, TP), lambda b, i, seed: (b, 0, i)),  # kl term
            ],
        ),
        compiler_params=pltpu.CompilerParams(
            dimension_semantics=("parallel", "parallel"),
            # TP <= 2048 keeps intermediates + double-buffered I/O well under this;
            # stays safe on v7x's 64 MiB physical VMEM.
            vmem_limit_bytes=32 * 1024 * 1024,
        ),
    )(seed_arr, x, w2, b2, embed_t)

    z_q = zq[:, :, :HW].reshape(B, D, H, W)                 # already NCHW-ordered
    diff = KL_WEIGHT * jnp.mean(kl[:, :, :HW])
    min_encoding_indices = idx[:, 0, :HW].reshape(B, H, W)
    return z_q, diff, {"min_encoding_indices": min_encoding_indices}


if __name__ == "__main__":
    key = jax.random.PRNGKey(0)
    k_z, k_w, k_b, k_e = jax.random.split(key, 4)

    B, H, W = 2, 16, 16
    z = jax.random.normal(k_z, (B, NUM_HIDDENS, H, W), dtype=jnp.float32)

    # deterministic parameter init (shapes per nn.Conv2d(num_hiddens, codebook_size, 1)
    # and nn.Embedding(codebook_size, emb_dim)); conv weight stored as (K, C_in).
    w_proj = jax.random.normal(k_w, (CODEBOOK_SIZE, NUM_HIDDENS), dtype=jnp.float32) * 0.02
    b_proj = jax.random.normal(k_b, (CODEBOOK_SIZE,), dtype=jnp.float32) * 0.01
    embed_w = jax.random.normal(k_e, (CODEBOOK_SIZE, EMB_DIM), dtype=jnp.float32)

    z_q, diff, info = gumbel_quantizer_forward(z, w_proj, b_proj, embed_w, seed=1234)
    jax.block_until_ready((z_q, diff, info["min_encoding_indices"]))

    assert z_q.shape == (B, EMB_DIM, H, W)
    assert info["min_encoding_indices"].shape == (B, H, W)
    assert diff.shape == ()
    assert bool(jnp.all(jnp.isfinite(z_q)))
    assert bool(jnp.isfinite(diff))
    assert bool(jnp.all((info["min_encoding_indices"] >= 0)
                        & (info["min_encoding_indices"] < CODEBOOK_SIZE)))
    print("KERNEL_OK")
</pallas_src>

<mosaic_0001>
module attributes {stable_mosaic.version = 11 : i64} {
  func.func @_gumbel_quant_kernel(%arg0: i32, %arg1: i32, %arg2: memref<1xi32, #tpu.memory_space<smem>>, %arg3: memref<1x32x256xbf16, #tpu.memory_space<vmem>>, %arg4: memref<128x32xbf16, #tpu.memory_space<vmem>>, %arg5: memref<128x1xf32, #tpu.memory_space<vmem>>, %arg6: memref<32x128xf32, #tpu.memory_space<vmem>>, %arg7: memref<1x32x256xf32, #tpu.memory_space<vmem>>, %arg8: memref<1x1x256xi32, #tpu.memory_space<vmem>>, %arg9: memref<1x1x256xf32, #tpu.memory_space<vmem>>) attributes {dimension_semantics = [#tpu.dimension_semantics<parallel>, #tpu.dimension_semantics<parallel>], iteration_bounds = array<i64: 2, 1>, scalar_prefetch = 1 : i64, scratch_operands = 0 : i64, tpu.core_type = #tpu.core_type<tc>, window_params = [{transform_indices = @transform_0, window_bounds = array<i64: 1, 32, 256>}, {pipeline_mode = #tpu.pipeline_mode<synchronous>, transform_indices = @transform_1, window_bounds = array<i64: 128, 32>}, {pipeline_mode = #tpu.pipeline_mode<synchronous>, transform_indices = @transform_2, window_bounds = array<i64: 128, 1>}, {pipeline_mode = #tpu.pipeline_mode<synchronous>, transform_indices = @transform_3, window_bounds = array<i64: 32, 128>}, {transform_indices = @transform_4, window_bounds = array<i64: 1, 32, 256>}, {transform_indices = @transform_5, window_bounds = array<i64: 1, 1, 256>}, {transform_indices = @transform_6, window_bounds = array<i64: 1, 1, 256>}]} {
    %c0 = arith.constant 0 : index
    %c0_0 = arith.constant 0 : index
    %0 = vector.load %arg4[%c0, %c0_0] : memref<128x32xbf16, #tpu.memory_space<vmem>>, vector<128x32xbf16>
    %c0_1 = arith.constant 0 : index
    %c0_2 = arith.constant 0 : index
    %c0_3 = arith.constant 0 : index
    %1 = vector.load %arg3[%c0_1, %c0_2, %c0_3] : memref<1x32x256xbf16, #tpu.memory_space<vmem>>, vector<1x32x256xbf16>
    %2 = vector.shape_cast %1 : vector<1x32x256xbf16> to vector<32x256xbf16>
    %cst = arith.constant dense<0.000000e+00> : vector<128x256xf32>
    %3 = tpu.matmul %0, %2, %cst {dimension_numbers = #tpu.dot_dimension_numbers<[1], [0], [0], [1], [0, 0, 1, 1], [], []>} : vector<128x32xbf16>, vector<32x256xbf16>, vector<128x256xf32> -> vector<128x256xf32>
    %c0_4 = arith.constant 0 : index
    %c0_5 = arith.constant 0 : index
    %4 = vector.load %arg5[%c0_4, %c0_5] : memref<128x1xf32, #tpu.memory_space<vmem>>, vector<128x1xf32>
    %5 = vector.broadcast %4 : vector<128x1xf32> to vector<128x256xf32>
    %6 = arith.addf %3, %5 : vector<128x256xf32>
    %7 = tpu.iota {dimensions = array<i32: 0>} : vector<128x256xi32>
    %8 = tpu.iota {dimensions = array<i32: 1>} : vector<128x256xi32>
    %cst_6 = arith.constant dense<0xFF800000> : vector<256xf32>
    %9 = vector.multi_reduction <maximumf>, %6, %cst_6 [0] : vector<128x256xf32> to vector<256xf32>
    %10 = vector.shape_cast %9 : vector<256xf32> to vector<1x256xf32>
    %11 = vector.broadcast %10 : vector<1x256xf32> to vector<128x256xf32>
    %12 = arith.subf %6, %11 : vector<128x256xf32>
    %13 = math.exp %12 : vector<128x256xf32>
    %c256_i32 = arith.constant 256 : i32
    %14 = arith.muli %arg0, %c256_i32 : i32
    %c256_i32_7 = arith.constant 256 : i32
    %15 = arith.muli %arg1, %c256_i32_7 : i32
    %16 = arith.addi %14, %15 : i32
    %17 = vector.broadcast %16 : i32 to vector<128x256xi32>
    %18 = arith.addi %17, %8 : vector<128x256xi32>
    %c128_i32 = arith.constant 128 : i32
    %19 = vector.broadcast %c128_i32 : i32 to vector<128x256xi32>
    %20 = arith.muli %18, %19 : vector<128x256xi32>
    %21 = arith.addi %20, %7 : vector<128x256xi32>
    %c0_8 = arith.constant 0 : index
    %22 = memref.load %arg2[%c0_8] : memref<1xi32, #tpu.memory_space<smem>>
    %c-1640531527_i32 = arith.constant -1640531527 : i32
    %23 = arith.muli %22, %c-1640531527_i32 : i32
    %24 = vector.broadcast %23 : i32 to vector<128x256xi32>
    %25 = arith.addi %21, %24 : vector<128x256xi32>
    %c16_i32 = arith.constant 16 : i32
    %26 = vector.broadcast %c16_i32 : i32 to vector<128x256xi32>
    %27 = arith.shrui %25, %26 : vector<128x256xi32>
    %28 = arith.xori %25, %27 : vector<128x256xi32>
    %c2146121005_i32 = arith.constant 2146121005 : i32
    %29 = vector.broadcast %c2146121005_i32 : i32 to vector<128x256xi32>
    %30 = arith.muli %28, %29 : vector<128x256xi32>
    %c15_i32 = arith.constant 15 : i32
    %31 = vector.broadcast %c15_i32 : i32 to vector<128x256xi32>
    %32 = arith.shrui %30, %31 : vector<128x256xi32>
    %33 = arith.xori %30, %32 : vector<128x256xi32>
    %c-2073254261_i32 = arith.constant -2073254261 : i32
    %34 = vector.broadcast %c-2073254261_i32 : i32 to vector<128x256xi32>
    %35 = arith.muli %33, %34 : vector<128x256xi32>
    %c16_i32_9 = arith.constant 16 : i32
    %36 = vector.broadcast %c16_i32_9 : i32 to vector<128x256xi32>
    %37 = arith.shrui %35, %36 : vector<128x256xi32>
    %38 = arith.xori %35, %37 : vector<128x256xi32>
    %c9_i32 = arith.constant 9 : i32
    %39 = vector.broadcast %c9_i32 : i32 to vector<128x256xi32>
    %40 = arith.shrui %38, %39 : vector<128x256xi32>
    %c1065353216_i32 = arith.constant 1065353216 : i32
    %41 = vector.broadcast %c1065353216_i32 : i32 to vector<128x256xi32>
    %42 = arith.ori %40, %41 : vector<128x256xi32>
    %43 = tpu.bitcast %42 : vector<128x256xi32> -> vector<128x256xf32>
    %cst_10 = arith.constant 1.000000e+00 : f32
    %44 = vector.broadcast %cst_10 : f32 to vector<128x256xf32>
    %45 = arith.subf %43, %44 : vector<128x256xf32>
    %cst_11 = arith.constant 9.99999996E-13 : f32
    %46 = vector.broadcast %cst_11 : f32 to vector<128x256xf32>
    %47 = arith.maximumf %45, %46 : vector<128x256xf32>
    %48 = math.log %47 : vector<128x256xf32>
    %cst_12 = arith.constant 0.000000e+00 : f32
    %49 = vector.broadcast %cst_12 : f32 to vector<128x256xf32>
    %50 = arith.subf %49, %48 : vector<128x256xf32>
    %51 = arith.divf %13, %50 : vector<128x256xf32>
    %cst_13 = arith.constant dense<0xFF800000> : vector<256xf32>
    %52 = vector.multi_reduction <maximumf>, %51, %cst_13 [0] : vector<128x256xf32> to vector<256xf32>
    %53 = vector.shape_cast %52 : vector<256xf32> to vector<1x256xf32>
    %54 = vector.broadcast %53 : vector<1x256xf32> to vector<128x256xf32>
    %55 = arith.cmpf oeq, %51, %54 : vector<128x256xf32>
    %c128_i32_14 = arith.constant 128 : i32
    %56 = vector.broadcast %c128_i32_14 : i32 to vector<128x256xi32>
    %57 = arith.select %55, %7, %56 : vector<128x256xi1>, vector<128x256xi32>
    %cst_15 = arith.constant dense<2147483647> : vector<256xi32>
    %58 = vector.multi_reduction <minsi>, %57, %cst_15 [0] : vector<128x256xi32> to vector<256xi32>
    %59 = vector.shape_cast %58 : vector<256xi32> to vector<1x256xi32>
    %60 = vector.broadcast %59 : vector<1x256xi32> to vector<128x256xi32>
    %61 = arith.cmpi eq, %7, %60 : vector<128x256xi32>
    %62 = arith.extui %61 : vector<128x256xi1> to vector<128x256xi32>
    %63 = arith.sitofp %62 : vector<128x256xi32> to vector<128x256xf32>
    %c0_16 = arith.constant 0 : index
    %c0_17 = arith.constant 0 : index
    %64 = vector.load %arg6[%c0_16, %c0_17] : memref<32x128xf32, #tpu.memory_space<vmem>>, vector<32x128xf32>
    %cst_18 = arith.constant dense<0.000000e+00> : vector<32x256xf32>
    %65 = tpu.matmul %64, %63, %cst_18 {dimension_numbers = #tpu.dot_dimension_numbers<[1], [0], [0], [1], [0, 0, 1, 1], [], []>} : vector<32x128xf32>, vector<128x256xf32>, vector<32x256xf32> -> vector<32x256xf32>
    %c0_19 = arith.constant 0 : index
    %c0_20 = arith.constant 0 : index
    %c0_21 = arith.constant 0 : index
    %66 = vector.load %arg7[%c0_19, %c0_20, %c0_21] : memref<1x32x256xf32, #tpu.memory_space<vmem>>, vector<1x32x256xf32>
    %67 = vector.shape_cast %66 : vector<1x32x256xf32> to vector<32x256xf32>
    %68 = vector.shape_cast %65 : vector<32x256xf32> to vector<1x32x256xf32>
    tpu.vector_store %arg7[%c0_19, %c0_20, %c0_21], %68 {strides = array<i32>} : memref<1x32x256xf32, #tpu.memory_space<vmem>>, vector<1x32x256xf32>,
    %c0_22 = arith.constant 0 : index
    %c0_23 = arith.constant 0 : index
    %c0_24 = arith.constant 0 : index
    %69 = vector.load %arg8[%c0_22, %c0_23, %c0_24] : memref<1x1x256xi32, #tpu.memory_space<vmem>>, vector<1x1x256xi32>
    %70 = vector.shape_cast %69 : vector<1x1x256xi32> to vector<1x256xi32>
    %71 = vector.shape_cast %59 : vector<1x256xi32> to vector<1x1x256xi32>
    tpu.vector_store %arg8[%c0_22, %c0_23, %c0_24], %71 {strides = array<i32>} : memref<1x1x256xi32, #tpu.memory_space<vmem>>, vector<1x1x256xi32>,
    %cst_25 = arith.constant dense<0.000000e+00> : vector<256xf32>
    %72 = vector.multi_reduction <add>, %13, %cst_25 [0] : vector<128x256xf32> to vector<256xf32>
    %73 = vector.shape_cast %72 : vector<256xf32> to vector<1x256xf32>
    %74 = arith.mulf %13, %12 : vector<128x256xf32>
    %cst_26 = arith.constant dense<0.000000e+00> : vector<256xf32>
    %75 = vector.multi_reduction <add>, %74, %cst_26 [0] : vector<128x256xf32> to vector<256xf32>
    %76 = vector.shape_cast %75 : vector<256xf32> to vector<1x256xf32>
    %77 = arith.divf %76, %73 : vector<1x256xf32>
    %78 = math.log %73 : vector<1x256xf32>
    %79 = arith.subf %77, %78 : vector<1x256xf32>
    %cst_27 = arith.constant 4.85203028 : f32
    %80 = vector.broadcast %cst_27 : f32 to vector<1x256xf32>
    %81 = arith.addf %79, %80 : vector<1x256xf32>
    %c0_28 = arith.constant 0 : index
    %c0_29 = arith.constant 0 : index
    %c0_30 = arith.constant 0 : index
    %82 = vector.load %arg9[%c0_28, %c0_29, %c0_30] : memref<1x1x256xf32, #tpu.memory_space<vmem>>, vector<1x1x256xf32>
    %83 = vector.shape_cast %82 : vector<1x1x256xf32> to vector<1x256xf32>
    %84 = vector.shape_cast %81 : vector<1x256xf32> to vector<1x1x256xf32>
    tpu.vector_store %arg9[%c0_28, %c0_29, %c0_30], %84 {strides = array<i32>} : memref<1x1x256xf32, #tpu.memory_space<vmem>>, vector<1x1x256xf32>,
    return
  }
  func.func @transform_0(%arg0: i32, %arg1: i32, %arg2: memref<1xi32, #tpu.memory_space<smem>>) -> (i32, i32, i32) {
    %c0_i32 = arith.constant 0 : i32
    %c0_i32_0 = arith.constant 0 : i32
    return %arg0, %c0_i32, %arg1 : i32, i32, i32
  }
  func.func @transform_1(%arg0: i32, %arg1: i32, %arg2: memref<1xi32, #tpu.memory_space<smem>>) -> (i32, i32) {
    %c0_i32 = arith.constant 0 : i32
    %c0_i32_0 = arith.constant 0 : i32
    %c0_i32_1 = arith.constant 0 : i32
    return %c0_i32, %c0_i32_0 : i32, i32
  }
  func.func @transform_2(%arg0: i32, %arg1: i32, %arg2: memref<1xi32, #tpu.memory_space<smem>>) -> (i32, i32) {
    %c0_i32 = arith.constant 0 : i32
    %c0_i32_0 = arith.constant 0 : i32
    %c0_i32_1 = arith.constant 0 : i32
    return %c0_i32, %c0_i32_0 : i32, i32
  }
  func.func @transform_3(%arg0: i32, %arg1: i32, %arg2: memref<1xi32, #tpu.memory_space<smem>>) -> (i32, i32) {
    %c0_i32 = arith.constant 0 : i32
    %c0_i32_0 = arith.constant 0 : i32
    %c0_i32_1 = arith.constant 0 : i32
    return %c0_i32, %c0_i32_0 : i32, i32
  }
  func.func @transform_4(%arg0: i32, %arg1: i32, %arg2: memref<1xi32, #tpu.memory_space<smem>>) -> (i32, i32, i32) {
    %c0_i32 = arith.constant 0 : i32
    %c0_i32_0 = arith.constant 0 : i32
    return %arg0, %c0_i32, %arg1 : i32, i32, i32
  }
  func.func @transform_5(%arg0: i32, %arg1: i32, %arg2: memref<1xi32, #tpu.memory_space<smem>>) -> (i32, i32, i32) {
    %c0_i32 = arith.constant 0 : i32
    %c0_i32_0 = arith.constant 0 : i32
    return %arg0, %c0_i32, %arg1 : i32, i32, i32
  }
  func.func @transform_6(%arg0: i32, %arg1: i32, %arg2: memref<1xi32, #tpu.memory_space<smem>>) -> (i32, i32, i32) {
    %c0_i32 = arith.constant 0 : i32
    %c0_i32_0 = arith.constant 0 : i32
    return %arg0, %c0_i32, %arg1 : i32, i32, i32
  }
}

</mosaic_0001>

<llo_original>
// kernel: squeeze.1
$region0: #{squeeze.1}
  %s0 = inlined_call_operand.vmem [shape: s32[2,256], index: 0, kind: input, shape index: {}]
  %s1 = inlined_call_operand.hbm [shape: s32[2,16,16], index: 1, kind: output, shape index: {}]
  $region1: #{squeeze.1} parent=0
    #allocation0 [shape = 'u8[16384]{0}', space=vmem, size = 0x4000, scoped, tag = 'operand span for operand 1']
    #allocation1 [shape = 's32[1]{0}', space=sflag, size = 0x4, scoped, tag = 'scoped memory for squeeze.1']
    #allocation2 [shape = 'u8[8192]{0}', space=vmem, size = 0x2000, scoped, tag = 'scoped mem for input reshape']
    %2 = vsyncpa [#allocation1], 0
    %s4 = sshllo.u32 0, 2
    %s5 = scalar_lea.vmem %s0, 2
    %v6 = vld [vmem:[%s5] sm:%s4]
    %s7 = scalar_lea.vmem [#allocation2], 8
    %8 = vst [vmem:[%s7] sm:%s4] %v6
    %v9 = vld [vmem:[%s0] sm:%s4]
    %10 = vst [vmem:[#allocation2] sm:%s4] %v9
    %v11 = vld [vmem:[#allocation2] sm:$0x3]
    %vm12 = vcmask 130048
    %13 = vst.msk [vmem:[#allocation0] ss:$16 sm:$0x3] %vm12, %v11
    %s14 = scalar_lea.vmem [#allocation2], 8
    %v15 = vld [vmem:[%s14] sm:$0x3]
    %vm16 = vcmask 130048
    %s17 = scalar_lea.vmem [#allocation0], 8
    %18 = vst.msk [vmem:[%s17] ss:$16 sm:$0x3] %vm16, %v15
    %v19 = vld.sshfl [vmem:[#allocation2] sm:$0xff pattern:$0x99999180]
    %20 = vrot.lane.b32.xlu0 %v19, 112
    %v21 = vpop.permute.xlu0 %20
    %vm22 = vcmask 130048
    %s23 = scalar_lea.vmem [#allocation0], 1
    %24 = vst.msk [vmem:[%s23] ss:$8 sm:$0xf] %vm22, %v21
    %v25 = vld.sshfl [vmem:[#allocation2] sm:$0xff pattern:$0x99999180]
    %26 = vrot.lane.b32.xlu0 %v25, 96
    %v27 = vpop.permute.xlu0 %26
    %vm28 = vcmask 130048
    %s29 = scalar_lea.vmem [#allocation0], 2
    %30 = vst.msk [vmem:[%s29] ss:$8 sm:$0xf] %vm28, %v27
    %v31 = vld.sshfl [vmem:[#allocation2] sm:$0xff pattern:$0x99999180]
    %32 = vrot.lane.b32.xlu0 %v31, 80
    %v33 = vpop.permute.xlu0 %32
    %vm34 = vcmask 130048
    %s35 = scalar_lea.vmem [#allocation0], 3
    %36 = vst.msk [vmem:[%s35] ss:$8 sm:$0xf] %vm34, %v33
    %v37 = vld.sshfl [vmem:[#allocation2] sm:$0xff pattern:$0x99999180]
    %38 = vrot.lane.b32.xlu0 %v37, 64
    %v39 = vpop.permute.xlu0 %38
    %vm40 = vcmask 130048
    %s41 = scalar_lea.vmem [#allocation0], 4
    %42 = vst.msk [vmem:[%s41] ss:$8 sm:$0xf] %vm40, %v39
    %v43 = vld.sshfl [vmem:[#allocation2] sm:$0xff pattern:$0x99999180]
    %44 = vrot.lane.b32.xlu0 %v43, 48
    %v45 = vpop.permute.xlu0 %44
    %vm46 = vcmask 130048
    %s47 = scalar_lea.vmem [#allocation0], 5
    %48 = vst.msk [vmem:[%s47] ss:$8 sm:$0xf] %vm46, %v45
    %v49 = vld.sshfl [vmem:[#allocation2] sm:$0xff pattern:$0x99999180]
    %50 = vrot.lane.b32.xlu0 %v49, 32
    %v51 = vpop.permute.xlu0 %50
    %vm52 = vcmask 130048
    %s53 = scalar_lea.vmem [#allocation0], 6
    %54 = vst.msk [vmem:[%s53] ss:$8 sm:$0xf] %vm52, %v51
    %v55 = vld.sshfl [vmem:[#allocation2] sm:$0xff pattern:$0x99999180]
    %56 = vrot.lane.b32.xlu0 %v55, 16
    %v57 = vpop.permute.xlu0 %56
    %vm58 = vcmask 130048
    %s59 = scalar_lea.vmem [#allocation0], 7
    %60 = vst.msk [vmem:[%s59] ss:$8 sm:$0xf] %vm58, %v57
    %s62 = ssub.s32 512, 512
    %63 = vsyncadd [#allocation1], %s62
    %s65 = sshll.u32 [#allocation0], 4
    %s66 = int_to_ptr.vmem [resolvable:$true] %s65
    %68 = dma.vmem_to_hbm [thread:$0]  %s66, 512, %s1, [#allocation1]
    %69 = dma.done [#allocation1], 512
    %70 = vsyncpa [#allocation1], 1

// kernel: gumbel_quantizer_forward.1
$region0: #{gumbel_quantizer_forward.1}
  #allocation0 [shape = 'u32[]', space=smem, size = 0x4, offset = 0x4, fixed_abs, tag = 'smem constant byte address 0x4 - core index']
  #allocation1 [shape = 'u32[144,128]{1,0:T(1,128)}', space=vmem, size = 0x12000, scoped, tag = 'internal scratch']
  #allocation2 [shape = 's32[1]{0}', space=sflag, size = 0x4, scoped, tag = 'scoped memory for gumbel_quantizer_forward.1']
  #allocation3 [shape = 's32[1]{0:T(128)S(6)}', space=smem, size = 0x200, scoped, tag = 'prefetched SMEM operand 0']
  %s0 = inlined_call_operand.<no memory space> [shape: s32[1], index: 0, kind: input, shape index: {}]
  %s1 = inlined_call_operand.vmem [shape: bf16[2,32,256], index: 1, kind: input, shape index: {}]
  %s2 = inlined_call_operand.vmem [shape: bf16[128,32], index: 2, kind: input, shape index: {}]
  %s3 = inlined_call_operand.vmem [shape: f32[128,1], index: 3, kind: input, shape index: {}]
  %s4 = inlined_call_operand.vmem [shape: f32[32,128], index: 4, kind: input, shape index: {}]
  %s5 = inlined_call_operand.vmem [shape: f32[2,32,256], index: 5, kind: output, shape index: {0}]
  %s6 = inlined_call_operand.vmem [shape: s32[2,1,256], index: 6, kind: output, shape index: {1}]
  %s7 = inlined_call_operand.vmem [shape: f32[2,1,256], index: 7, kind: output, shape index: {2}]
  %8 = xla_tuple %s5, %s6, %s7
  %s9 = sld [smem:[#allocation0]]
  $region65: #{gumbel_quantizer_forward.1} parent=0
    _
  %s11 = ssub.s32 1, %s9
  %s12 = scalar_select 0, %s11, %s9
  %13 = sst [smem:[#allocation3]] %s0
  loop: start=0, step=1, limit=4
  $region2: #{gumbel_quantizer_forward.1} parent=0 // loop_pre_header
    _
  $region3: #{gumbel_quantizer_forward.1} parent=0 // loop_header
    %s15 = sphi 0, %s19
    %p16 = scmp.ge.s32.totalorder %s15, 4
    %s22 = sphi 0, %s34
    %s23 = sphi 0, %s30
    %s24 = sphi 0, %s22
    %s25 = sphi 0, %s23
    %s26 = sphi 0, %s24
    %s27 = sphi 0, %s25
    %s39 = sphi 0, %s41
    %s42 = sphi 0, %s39
    %s43 = sphi 0, %s42
    %s59 = sphi 0, %s43
    %s63 = sphi 0, %s63
    %s65 = sphi 0, %s63
    %s66 = sphi 0, %s65
    %s80 = sphi 0, %s66
    %s84 = sphi 0, %s84
    %s86 = sphi 0, %s84
    %s87 = sphi 0, %s86
    %s101 = sphi 0, %s87
    %s105 = sphi 0, %s105
    %s107 = sphi 0, %s105
    %s108 = sphi 0, %s107
    %s122 = sphi 0, %s108
    %s130 = sphi 0, %s132
    %s133 = sphi 0, %s130
    %s134 = sphi 0, %s133
    %s150 = sphi 0, %s134
    %s158 = sphi 0, %s160
    %s161 = sphi 0, %s158
    %s162 = sphi 0, %s161
    %s178 = sphi 0, %s162
    %s186 = sphi 0, %s188
    %s189 = sphi 0, %s186
    %s190 = sphi 0, %s189
    %s206 = sphi 0, %s190
  $region4: #{gumbel_quantizer_forward.1} parent=0 // loop_header_branch
    %18 = sbr.rel (%p16) target = $region8
  $region5: #{gumbel_quantizer_forward.1} parent=0 // loop_body
    %s20 = ssub.s32 %s15, 1
    %s21 = ssub.s32 %s15, 2
    %s28 = sadd.s32 1, %s23
    %p29 = scmp.ge.s32.totalorder %s28, 1
    %s30 = scalar_select %p29, 0, %s28
    %s31 = sadd.s32 1, %s22
    %s32 = scalar_select %p29, %s31, %s22
    %p33 = scmp.ge.s32.totalorder %s32, 2
    %s34 = scalar_select %p33, 0, %s32
    %s35 = ssub.s32 %s22, %s34
    %s36 = ssub.s32 %s23, %s30
    %s37 = sor.u32 %s35, %s36
    %p38 = scmp.eq.s32.totalorder %s37, 0
    %s40 = sadd.s32 %s39, 1
    %s41 = scalar_select %p38, %s39, %s40
    %p44 = pneg %p38
    %p45 = scmp.eq.s32.totalorder %s15, 1
    %p46 = por %p44, %p45
    %p47 = scmp.ne.s32.totalorder %s39, %s42
    %p48 = scmp.eq.s32.totalorder %s15, 0
    %p49 = por %p47, %p48
    %p50 = scmp.ne.s32.totalorder %s39, %s42
    %p51 = scmp.eq.s32.totalorder %s20, 1
    %p52 = por %p50, %p51
    %p53 = scmp.ne.s32.totalorder %s42, %s43
    %p54 = scmp.eq.s32.totalorder %s20, 0
    %p55 = por %p53, %p54
    %p56 = scmp.ne.s32.totalorder %s42, %s43
    %p57 = scmp.eq.s32.totalorder %s21, 1
    %p58 = por %p56, %p57
    %p60 = scmp.ne.s32.totalorder %s43, %s59
    %p61 = scmp.eq.s32.totalorder %s21, 0
    %p62 = por %p60, %p61
    %s64 = sadd.s32 %s63, 1
    %p67 = scmp.eq.s32.totalorder %s15, 1
    %p68 = scmp.ne.s32.totalorder %s63, %s65
    %p69 = scmp.eq.s32.totalorder %s15, 0
    %p70 = por %p68, %p69
    %p71 = scmp.ne.s32.totalorder %s63, %s65
    %p72 = scmp.eq.s32.totalorder %s20, 1
    %p73 = por %p71, %p72
    %p74 = scmp.ne.s32.totalorder %s65, %s66
    %p75 = scmp.eq.s32.totalorder %s20, 0
    %p76 = por %p74, %p75
    %p77 = scmp.ne.s32.totalorder %s65, %s66
    %p78 = scmp.eq.s32.totalorder %s21, 1
    %p79 = por %p77, %p78
    %p81 = scmp.ne.s32.totalorder %s66, %s80
    %p82 = scmp.eq.s32.totalorder %s21, 0
    %p83 = por %p81, %p82
    %s85 = sadd.s32 %s84, 1
    %p88 = scmp.eq.s32.totalorder %s15, 1
    %p89 = scmp.ne.s32.totalorder %s84, %s86
    %p90 = scmp.eq.s32.totalorder %s15, 0
    %p91 = por %p89, %p90
    %p92 = scmp.ne.s32.totalorder %s84, %s86
    %p93 = scmp.eq.s32.totalorder %s20, 1
    %p94 = por %p92, %p93
    %p95 = scmp.ne.s32.totalorder %s86, %s87
    %p96 = scmp.eq.s32.totalorder %s20, 0
    %p97 = por %p95, %p96
    %p98 = scmp.ne.s32.totalorder %s86, %s87
    %p99 = scmp.eq.s32.totalorder %s21, 1
    %p100 = por %p98, %p99
    %p102 = scmp.ne.s32.totalorder %s87, %s101
    %p103 = scmp.eq.s32.totalorder %s21, 0
    %p104 = por %p102, %p103
    %s106 = sadd.s32 %s105, 1
    %p109 = scmp.eq.s32.totalorder %s15, 1
    %p110 = scmp.ne.s32.totalorder %s105, %s107
    %p111 = scmp.eq.s32.totalorder %s15, 0
    %p112 = por %p110, %p111
    %p113 = scmp.ne.s32.totalorder %s105, %s107
    %p114 = scmp.eq.s32.totalorder %s20, 1
    %p115 = por %p113, %p114
    %p116 = scmp.ne.s32.totalorder %s107, %s108
    %p117 = scmp.eq.s32.totalorder %s20, 0
    %p118 = por %p116, %p117
    %p119 = scmp.ne.s32.totalorder %s107, %s108
    %p120 = scmp.eq.s32.totalorder %s21, 1
    %p121 = por %p119, %p120
    %p123 = scmp.ne.s32.totalorder %s108, %s122
    %p124 = scmp.eq.s32.totalorder %s21, 0
    %p125 = por %p123, %p124
    %s126 = ssub.s32 %s22, %s34
    %s127 = ssub.s32 %s23, %s30
    %s128 = sor.u32 %s126, %s127
    %p129 = scmp.eq.s32.totalorder %s128, 0
    %s131 = sadd.s32 %s130, 1
    %s132 = scalar_select %p129, %s130, %s131
    %p135 = pneg %p129
    %p136 = scmp.eq.s32.totalorder %s15, 1
    %p137 = por %p135, %p136
    %p138 = scmp.ne.s32.totalorder %s130, %s133
    %p139 = scmp.eq.s32.totalorder %s15, 0
    %p140 = por %p138, %p139
    %p141 = scmp.ne.s32.totalorder %s130, %s133
    %p142 = scmp.eq.s32.totalorder %s20, 1
    %p143 = por %p141, %p142
    %p144 = scmp.ne.s32.totalorder %s133, %s134
    %p145 = scmp.eq.s32.totalorder %s20, 0
    %p146 = por %p144, %p145
    %p147 = scmp.ne.s32.totalorder %s133, %s134
    %p148 = scmp.eq.s32.totalorder %s21, 1
    %p149 = por %p147, %p148
    %p151 = scmp.ne.s32.totalorder %s134, %s150
    %p152 = scmp.eq.s32.totalorder %s21, 0
    %p153 = por %p151, %p152
    %s154 = ssub.s32 %s22, %s34
    %s155 = ssub.s32 %s23, %s30
    %s156 = sor.u32 %s154, %s155
    %p157 = scmp.eq.s32.totalorder %s156, 0
    %s159 = sadd.s32 %s158, 1
    %s160 = scalar_select %p157, %s158, %s159
    %p163 = pneg %p157
    %p164 = scmp.eq.s32.totalorder %s15, 1
    %p165 = por %p163, %p164
    %p166 = scmp.ne.s32.totalorder %s158, %s161
    %p167 = scmp.eq.s32.totalorder %s15, 0
    %p168 = por %p166, %p167
    %p169 = scmp.ne.s32.totalorder %s158, %s161
    %p170 = scmp.eq.s32.totalorder %s20, 1
    %p171 = por %p169, %p170
    %p172 = scmp.ne.s32.totalorder %s161, %s162
    %p173 = scmp.eq.s32.totalorder %s20, 0
    %p174 = por %p172, %p173
    %p175 = scmp.ne.s32.totalorder %s161, %s162
    %p176 = scmp.eq.s32.totalorder %s21, 1
    %p177 = por %p175, %p176
    %p179 = scmp.ne.s32.totalorder %s162, %s178
    %p180 = scmp.eq.s32.totalorder %s21, 0
    %p181 = por %p179, %p180
    %s182 = ssub.s32 %s22, %s34
    %s183 = ssub.s32 %s23, %s30
    %s184 = sor.u32 %s182, %s183
    %p185 = scmp.eq.s32.totalorder %s184, 0
    %s187 = sadd.s32 %s186, 1
    %s188 = scalar_select %p185, %s186, %s187
    %p191 = pneg %p185
    %p192 = scmp.eq.s32.totalorder %s15, 1
    %p193 = por %p191, %p192
    %p194 = scmp.ne.s32.totalorder %s186, %s189
    %p195 = scmp.eq.s32.totalorder %s15, 0
    %p196 = por %p194, %p195
    %p197 = scmp.ne.s32.totalorder %s186, %s189
    %p198 = scmp.eq.s32.totalorder %s20, 1
    %p199 = por %p197, %p198
    %p200 = scmp.ne.s32.totalorder %s189, %s190
    %p201 = scmp.eq.s32.totalorder %s20, 0
    %p202 = por %p200, %p201
    %p203 = scmp.ne.s32.totalorder %s189, %s190
    %p204 = scmp.eq.s32.totalorder %s21, 1
    %p205 = por %p203, %p204
    %p207 = scmp.ne.s32.totalorder %s190, %s206
    %p208 = scmp.eq.s32.totalorder %s21, 0
    %p209 = por %p207, %p208
    %p210 = scmp.le.s32.totalorder 1, %s15
    %p211 = scmp.lt.s32.totalorder %s15, 3
    %p212 = pnand %p210, %p211
    %p213 = pneg %p212
    // Predicated region
    $region9: #{gumbel_quantizer_forward.1} parent=5 // pred_check
      _
    $region10: #{gumbel_quantizer_forward.1} parent=5 // pred_check_branch
      %215 = sbr.rel (%p212) target = $region12
    $region11: #{gumbel_quantizer_forward.1} parent=5 // pred_region
      %s216 = ssub.s32 %s15, 1
      // Predicated region
      $region13: #{gumbel_quantizer_forward.1} parent=11 // pred_check
        %p217 = pneg %p76
      $region14: #{gumbel_quantizer_forward.1} parent=11 // pred_check_branch
        %219 = sbr.rel (%p217) target = $region16
      $region15: #{gumbel_quantizer_forward.1} parent=11 // pred_region
        _
      $region16: #{gumbel_quantizer_forward.1} parent=11 // pred_fallthru
        _
      // Predicated region
      $region17: #{gumbel_quantizer_forward.1} parent=11 // pred_check
        %p220 = pneg %p97
      $region18: #{gumbel_quantizer_forward.1} parent=11 // pred_check_branch
        %222 = sbr.rel (%p220) target = $region20
      $region19: #{gumbel_quantizer_forward.1} parent=11 // pred_region
        _
      $region20: #{gumbel_quantizer_forward.1} parent=11 // pred_fallthru
        _
      // Predicated region
      $region21: #{gumbel_quantizer_forward.1} parent=11 // pred_check
        %p223 = pneg %p118
      $region22: #{gumbel_quantizer_forward.1} parent=11 // pred_check_branch
        %225 = sbr.rel (%p223) target = $region24
      $region23: #{gumbel_quantizer_forward.1} parent=11 // pred_region
        _
      $region24: #{gumbel_quantizer_forward.1} parent=11 // pred_fallthru
        _
    $region12: #{gumbel_quantizer_forward.1} parent=5 // pred_fallthru
      _
    %p226 = scmp.lt.s32.totalorder %s15, 2
    // Predicated region
    $region25: #{gumbel_quantizer_forward.1} parent=5 // pred_check
      %p227 = pneg %p226
    $region26: #{gumbel_quantizer_forward.1} parent=5 // pred_check_branch
      %229 = sbr.rel (%p227) target = $region28
    $region27: #{gumbel_quantizer_forward.1} parent=5 // pred_region
      // Predicated region
      $region29: #{gumbel_quantizer_forward.1} parent=27 // pred_check
        %p230 = pneg %p49
      $region30: #{gumbel_quantizer_forward.1} parent=27 // pred_check_branch
        %232 = sbr.rel (%p230) target = $region32
      $region31: #{gumbel_quantizer_forward.1} parent=27 // pred_region
        %s233 = smul.u32 2, %s23
        %p234 = scmp.lt.s32.totalorder %s22, 1
        %s235 = scalar_select %p234, %s22, 1
        %p236 = scmp.lt.s32.totalorder %s233, 1
        %s237 = scalar_select %p236, %s233, 1
        %s238 = smul.addr %s235, 8
        %s239 = sadd.s32 %s237, %s238
        %s240 = smul.addr %s239, 4
        %s241 = scalar_lea.vmem %s1, %s240
        %s242 = smul.u32 2, %s23
      $region32: #{gumbel_quantizer_forward.1} parent=27 // pred_fallthru
        _
    $region28: #{gumbel_quantizer_forward.1} parent=5 // pred_fallthru
      _
    %p243 = scmp.le.s32.totalorder 1, %s15
    %p244 = scmp.lt.s32.totalorder %s15, 3
    %p245 = pnand %p243, %p244
    %p246 = pneg %p245
    // Predicated region
    $region33: #{gumbel_quantizer_forward.1} parent=5 // pred_check
      _
    $region34: #{gumbel_quantizer_forward.1} parent=5 // pred_check_branch
      %248 = sbr.rel (%p245) target = $region36
    $region35: #{gumbel_quantizer_forward.1} parent=5 // pred_region
      %s249 = ssub.s32 %s15, 1
      %s250 = smul.u32 2, %s25
      %p251 = scmp.lt.s32.totalorder %s24, 1
      %s252 = scalar_select %p251, %s24, 1
      %p253 = scmp.lt.s32.totalorder %s250, 1
      %s254 = scalar_select %p253, %s250, 1
      %s255 = smul.addr %s252, 8
      %s256 = sadd.s32 %s254, %s255
      %s257 = smul.addr %s256, 4
      %s258 = scalar_lea.vmem %s1, %s257
      %p259 = pneg %p55
      %p260 = pneg %p52
      %p261 = pneg %p76
      %p262 = pneg %p73
      %p263 = pneg %p97
      %p264 = pneg %p94
      %p265 = pneg %p118
      %p266 = pneg %p115
      %p267 = pneg %p146
      %p268 = pneg %p143
      %s269 = smul.u32 2, %s25
      %p270 = scmp.lt.s32.totalorder %s24, 1
      %s271 = scalar_select %p270, %s24, 1
      %p272 = scmp.lt.s32.totalorder %s269, 1
      %s273 = scalar_select %p272, %s269, 1
      %s274 = smul.addr %s271, 8
      %s275 = sadd.s32 %s273, %s274
      %s276 = smul.addr %s275, 8
      %s277 = scalar_lea.vmem %s5, %s276
      %p278 = pneg %p174
      %p279 = pneg %p171
      %s280 = smul.u32 2, %s25
      %p281 = scmp.lt.s32.totalorder %s24, 1
      %s282 = scalar_select %p281, %s24, 1
      %p283 = scmp.lt.s32.totalorder %s280, 1
      %s284 = scalar_select %p283, %s280, 1
      %s285 = smul.addr %s282, 2
      %s286 = sadd.s32 %s284, %s285
      %s287 = scalar_lea.vmem %s6, %s286
      %p288 = pneg %p202
      %p289 = pneg %p199
      %s290 = smul.u32 2, %s25
      %p291 = scmp.lt.s32.totalorder %s24, 1
      %s292 = scalar_select %p291, %s24, 1
      %p293 = scmp.lt.s32.totalorder %s290, 1
      %s294 = scalar_select %p293, %s290, 1
      %s295 = smul.addr %s292, 2
      %s296 = sadd.s32 %s294, %s295
      %s297 = scalar_lea.vmem %s7, %s296
      %s298 = smul.u32 2, %s25
      %p299 = scmp.lt.s32.totalorder %s24, 1
      %s300 = scalar_select %p299, %s24, 1
      %p301 = scmp.lt.s32.totalorder %s298, 1
      %s302 = scalar_select %p301, %s298, 1
      %s303 = smul.addr %s300, 8
      %s304 = sadd.s32 %s302, %s303
      %s305 = smul.addr %s304, 4
      %s306 = scalar_lea.vmem %s1, %s305
      %s307 = smul.u32 2, %s25
      %s308 = smul.u32 2, %s25
      %p309 = scmp.lt.s32.totalorder %s24, 1
      %s310 = scalar_select %p309, %s24, 1
      %p311 = scmp.lt.s32.totalorder %s308, 1
      %s312 = scalar_select %p311, %s308, 1
      %s313 = smul.addr %s310, 8
      %s314 = sadd.s32 %s312, %s313
      %s315 = smul.addr %s314, 8
      %s316 = scalar_lea.vmem %s5, %s315
      %s317 = smul.u32 2, %s25
      %s318 = smul.u32 2, %s25
      %p319 = scmp.lt.s32.totalorder %s24, 1
      %s320 = scalar_select %p319, %s24, 1
      %p321 = scmp.lt.s32.totalorder %s318, 1
      %s322 = scalar_select %p321, %s318, 1
      %s323 = smul.addr %s320, 2
      %s324 = sadd.s32 %s322, %s323
      %s325 = scalar_lea.vmem %s6, %s324
      %s326 = smul.u32 2, %s25
      %s327 = smul.u32 2, %s25
      %p328 = scmp.lt.s32.totalorder %s24, 1
      %s329 = scalar_select %p328, %s24, 1
      %p330 = scmp.lt.s32.totalorder %s327, 1
      %s331 = scalar_select %p330, %s327, 1
      %s332 = smul.addr %s329, 2
      %s333 = sadd.s32 %s331, %s332
      %s334 = scalar_lea.vmem %s7, %s333
      %s335 = smul.u32 2, %s25
      %v337 = vld [vmem:[%s2] sm:$0xf]
      %v338 = vld [vmem:[%s2 + $0x4] sm:$0xf]
      %v339 = vld [vmem:[%s2 + $0x8] sm:$0xf]
      %v340 = vld [vmem:[%s2 + $0xc] sm:$0xf]
      %v341 = vld [vmem:[%s2 + $0x10] sm:$0xf]
      %v342 = vld [vmem:[%s2 + $0x14] sm:$0xf]
      %v343 = vld [vmem:[%s2 + $0x18] sm:$0xf]
      %v344 = vld [vmem:[%s2 + $0x1c] sm:$0xf]
      %v345 = vld [vmem:[%s2 + $0x20] sm:$0xf]
      %v346 = vld [vmem:[%s2 + $0x24] sm:$0xf]
      %v347 = vld [vmem:[%s2 + $0x28] sm:$0xf]
      %v348 = vld [vmem:[%s2 + $0x2c] sm:$0xf]
      %v349 = vld [vmem:[%s2 + $0x30] sm:$0xf]
      %v350 = vld [vmem:[%s2 + $0x34] sm:$0xf]
      %v351 = vld [vmem:[%s2 + $0x38] sm:$0xf]
      %v352 = vld [vmem:[%s2 + $0x3c] sm:$0xf]
      %v353 = vld [vmem:[%s306] sm:$0xff]
      %v354 = vld [vmem:[%s306 + $0x8] sm:$0xff]
      %v355 = vld [vmem:[%s306 + $0x10] sm:$0xff]
      %v356 = vld [vmem:[%s306 + $0x18] sm:$0xff]
      %v357 = vld [vmem:[%s3] sm:$0xff]
      %v358 = vld [vmem:[%s3 + $0x8] sm:$0xff]
      %v359 = vld [vmem:[%s3 + $0x10] sm:$0xff]
      %v360 = vld [vmem:[%s3 + $0x18] sm:$0xff]
      %v361 = vld [vmem:[%s3 + $0x20] sm:$0xff]
      %v362 = vld [vmem:[%s3 + $0x28] sm:$0xff]
      %v363 = vld [vmem:[%s3 + $0x30] sm:$0xff]
      %v364 = vld [vmem:[%s3 + $0x38] sm:$0xff]
      %v365 = vld [vmem:[%s3 + $0x40] sm:$0xff]
      %v366 = vld [vmem:[%s3 + $0x48] sm:$0xff]
      %v367 = vld [vmem:[%s3 + $0x50] sm:$0xff]
      %v368 = vld [vmem:[%s3 + $0x58] sm:$0xff]
      %v369 = vld [vmem:[%s3 + $0x60] sm:$0xff]
      %v370 = vld [vmem:[%s3 + $0x68] sm:$0xff]
      %v371 = vld [vmem:[%s3 + $0x70] sm:$0xff]
      %v372 = vld [vmem:[%s3 + $0x78] sm:$0xff]
      %374 = vset.pattern.permute.xlu0 0
      %375 = vperm.xlu0 %374, %v357
      %v376 = vpop.permute.xlu0 %375
      %379 = vset.pattern.permute.xlu0 0
      %380 = vperm.xlu0 %379, %v358
      %v381 = vpop.permute.xlu0 %380
      %384 = vset.pattern.permute.xlu0 0
      %385 = vperm.xlu0 %384, %v359
      %v386 = vpop.permute.xlu0 %385
      %389 = vset.pattern.permute.xlu0 0
      %390 = vperm.xlu0 %389, %v360
      %v391 = vpop.permute.xlu0 %390
      %394 = vset.pattern.permute.xlu0 0
      %395 = vperm.xlu0 %394, %v361
      %v396 = vpop.permute.xlu0 %395
      %399 = vset.pattern.permute.xlu0 0
      %400 = vperm.xlu0 %399, %v362
      %v401 = vpop.permute.xlu0 %400
      %404 = vset.pattern.permute.xlu0 0
      %405 = vperm.xlu0 %404, %v363
      %v406 = vpop.permute.xlu0 %405
      %409 = vset.pattern.permute.xlu0 0
      %410 = vperm.xlu0 %409, %v364
      %v411 = vpop.permute.xlu0 %410
      %414 = vset.pattern.permute.xlu0 0
      %415 = vperm.xlu0 %414, %v365
      %v416 = vpop.permute.xlu0 %415
      %419 = vset.pattern.permute.xlu0 0
      %420 = vperm.xlu0 %419, %v366
      %v421 = vpop.permute.xlu0 %420
      %424 = vset.pattern.permute.xlu0 0
      %425 = vperm.xlu0 %424, %v367
      %v426 = vpop.permute.xlu0 %425
      %429 = vset.pattern.permute.xlu0 0
      %430 = vperm.xlu0 %429, %v368
      %v431 = vpop.permute.xlu0 %430
      %434 = vset.pattern.permute.xlu0 0
      %435 = vperm.xlu0 %434, %v369
      %v436 = vpop.permute.xlu0 %435
      %439 = vset.pattern.permute.xlu0 0
      %440 = vperm.xlu0 %439, %v370
      %v441 = vpop.permute.xlu0 %440
      %444 = vset.pattern.permute.xlu0 0
      %445 = vperm.xlu0 %444, %v371
      %v446 = vpop.permute.xlu0 %445
      %449 = vset.pattern.permute.xlu0 0
      %450 = vperm.xlu0 %449, %v372
      %v451 = vpop.permute.xlu0 %450
      %v469 = vunpack.c.l.b16 %v337
      %v470 = vunpack.c.l.b16 %v338
      %v471 = vunpack.c.l.b16 %v339
      %v472 = vunpack.c.l.b16 %v340
      %v473 = vunpack.c.l.b16 %v341
      %v474 = vunpack.c.l.b16 %v342
      %v475 = vunpack.c.l.b16 %v343
      %v476 = vunpack.c.l.b16 %v344
      %v477 = vunpack.c.l.b16 %v345
      %v478 = vunpack.c.l.b16 %v346
      %v479 = vunpack.c.l.b16 %v347
      %v480 = vunpack.c.l.b16 %v348
      %v481 = vunpack.c.l.b16 %v349
      %v482 = vunpack.c.l.b16 %v350
      %v483 = vunpack.c.l.b16 %v351
      %v484 = vunpack.c.l.b16 %v352
      %v485 = vpack.c.b16 %v470, %v469
      %v486 = vpack.c.b16 %v472, %v471
      %v487 = vpack.c.b16 %v474, %v473
      %v488 = vpack.c.b16 %v476, %v475
      %v489 = vpack.c.b16 %v478, %v477
      %v490 = vpack.c.b16 %v480, %v479
      %v491 = vpack.c.b16 %v482, %v481
      %v492 = vpack.c.b16 %v484, %v483
      %v497 = vunpack.c.l.b16 %v353
      %v498 = vunpack.c.h.b16 %v353
      %v499 = vunpack.c.l.b16 %v354
      %v500 = vunpack.c.h.b16 %v354
      %v501 = vunpack.c.l.b16 %v355
      %v502 = vunpack.c.h.b16 %v355
      %v503 = vunpack.c.l.b16 %v356
      %v504 = vunpack.c.h.b16 %v356
      %v505 = vpack.c.b16 %v499, %v497
      %v506 = vpack.c.b16 %v500, %v498
      %v507 = vpack.c.b16 %v503, %v501
      %v508 = vpack.c.b16 %v504, %v502
      %vm513 = vcmask 261120
      %v515 = vsel %vm513, %v485, 0
      %v518 = vsel %vm513, %v486, 0
      %v521 = vsel %vm513, %v487, 0
      %v524 = vsel %vm513, %v488, 0
      %v527 = vsel %vm513, %v489, 0
      %v530 = vsel %vm513, %v490, 0
      %v533 = vsel %vm513, %v491, 0
      %v536 = vsel %vm513, %v492, 0
      %538 = vmatprep.subr.bf16.mxu0 %v506
      %539 = vmatpush1.bf16.msra.mxu0 %v505
      %540 = vmatprep.subr.bf16.mxu0 %v508
      %541 = vmatpush1.bf16.msra.mxu0 %v507
      %542 = vmatprep.subr.bf16.mxu0 0
      %543 = vmatpush1.bf16.msra.mxu0 0
      %544 = vmatprep.subr.bf16.mxu0 0
      %545 = vmatpush1.bf16.msra.mxu0 0
      %546 = vmatprep.subr.bf16.mxu0 0
      %547 = vmatpush1.bf16.msra.mxu0 0
      %548 = vmatprep.subr.bf16.mxu0 0
      %549 = vmatpush1.bf16.msra.mxu0 0
      %550 = vmatprep.subr.bf16.mxu0 0
      %551 = vmatpush1.bf16.msra.mxu0 0
      %552 = vmatprep.subr.bf16.mxu0 0
      %553 = vmatpush1.bf16.msra.mxu0 0
      %554 = vmatprep.subr.bf16.mxu0 0
      %555 = vmatpush1.bf16.msra.mxu0 0
      %556 = vmatprep.subr.bf16.mxu0 0
      %557 = vmatpush1.bf16.msra.mxu0 0
      %558 = vmatprep.subr.bf16.mxu0 0
      %559 = vmatpush1.bf16.msra.mxu0 0
      %560 = vmatprep.subr.bf16.mxu0 0
      %561 = vmatpush1.bf16.msra.mxu0 0
      %562 = vmatprep.subr.bf16.mxu0 0
      %563 = vmatpush1.bf16.msra.mxu0 0
      %564 = vmatprep.subr.bf16.mxu0 0
      %565 = vmatpush1.bf16.msra.mxu0 0
      %566 = vmatprep.subr.bf16.mxu0 0
      %567 = vmatpush1.bf16.msra.mxu0 0
      %568 = vmatprep.subr.bf16.mxu0 0
      %569 = vmatpush1.bf16.msra.mxu0 0
      %570 = vmatprep.mubr.bf16.mxu0 0
      %571 = vmatmul.mubr.bf16.gmra.mrb[0].mxu0 %v515
      %v572 = vpop.f32.mrb[0].mxu0
      %v573 = vadd.f32 %v376, %v572
      %v574 = vpop.f32.mrb[0].mxu0
      %v575 = vadd.f32 %v376, %v574
      %v576 = vpop.f32.mrb[0].mxu0
      %v577 = vadd.f32 %v381, %v576
      %v578 = vpop.f32.mrb[0].mxu0
      %v579 = vadd.f32 %v381, %v578
      %580 = vmatprep.mubr.bf16.mxu0 0
      %581 = vmatmul.mubr.bf16.gmra.mrb[0].mxu0 %v518
      %v582 = vpop.f32.mrb[0].mxu0
      %v583 = vadd.f32 %v386, %v582
      %v584 = vpop.f32.mrb[0].mxu0
      %v585 = vadd.f32 %v386, %v584
      %v586 = vpop.f32.mrb[0].mxu0
      %v587 = vadd.f32 %v391, %v586
      %v588 = vpop.f32.mrb[0].mxu0
      %v589 = vadd.f32 %v391, %v588
      %590 = vmatprep.mubr.bf16.mxu0 0
      %591 = vmatmul.mubr.bf16.gmra.mrb[0].mxu0 %v521
      %v592 = vpop.f32.mrb[0].mxu0
      %v593 = vadd.f32 %v396, %v592
      %v594 = vpop.f32.mrb[0].mxu0
      %v595 = vadd.f32 %v396, %v594
      %v596 = vpop.f32.mrb[0].mxu0
      %v597 = vadd.f32 %v401, %v596
      %v598 = vpop.f32.mrb[0].mxu0
      %v599 = vadd.f32 %v401, %v598
      %600 = vmatprep.mubr.bf16.mxu0 0
      %601 = vmatmul.mubr.bf16.gmra.mrb[0].mxu0 %v524
      %v602 = vpop.f32.mrb[0].mxu0
      %v603 = vadd.f32 %v406, %v602
      %v604 = vpop.f32.mrb[0].mxu0
      %v605 = vadd.f32 %v406, %v604
      %v606 = vpop.f32.mrb[0].mxu0
      %v607 = vadd.f32 %v411, %v606
      %v608 = vpop.f32.mrb[0].mxu0
      %v609 = vadd.f32 %v411, %v608
      %610 = vmatprep.mubr.bf16.mxu0 0
      %611 = vmatmul.mubr.bf16.gmra.mrb[0].mxu0 %v527
      %v612 = vpop.f32.mrb[0].mxu0
      %v613 = vadd.f32 %v416, %v612
      %v614 = vpop.f32.mrb[0].mxu0
      %v615 = vadd.f32 %v416, %v614
      %v616 = vpop.f32.mrb[0].mxu0
      %v617 = vadd.f32 %v421, %v616
      %v618 = vpop.f32.mrb[0].mxu0
      %v619 = vadd.f32 %v421, %v618
      %620 = vmatprep.mubr.bf16.mxu0 0
      %621 = vmatmul.mubr.bf16.gmra.mrb[0].mxu0 %v530
      %v622 = vpop.f32.mrb[0].mxu0
      %v623 = vadd.f32 %v426, %v622
      %v624 = vpop.f32.mrb[0].mxu0
      %v625 = vadd.f32 %v426, %v624
      %v626 = vpop.f32.mrb[0].mxu0
      %v627 = vadd.f32 %v431, %v626
      %v628 = vpop.f32.mrb[0].mxu0
      %v629 = vadd.f32 %v431, %v628
      %630 = vmatprep.mubr.bf16.mxu0 0
      %631 = vmatmul.mubr.bf16.gmra.mrb[0].mxu0 %v533
      %v632 = vpop.f32.mrb[0].mxu0
      %v633 = vadd.f32 %v436, %v632
      %v634 = vpop.f32.mrb[0].mxu0
      %v635 = vadd.f32 %v436, %v634
      %v636 = vpop.f32.mrb[0].mxu0
      %v637 = vadd.f32 %v441, %v636
      %v638 = vpop.f32.mrb[0].mxu0
      %v639 = vadd.f32 %v441, %v638
      %640 = vmatprep.mubr.bf16.mxu0 0
      %641 = vmatmul.mubr.bf16.gmra.mrb[0].mxu0 %v536
      %v642 = vpop.f32.mrb[0].mxu0
      %v643 = vadd.f32 %v446, %v642
      %v644 = vpop.f32.mrb[0].mxu0
      %v645 = vadd.f32 %v446, %v644
      %v646 = vpop.f32.mrb[0].mxu0
      %v647 = vadd.f32 %v451, %v646
      %v648 = vpop.f32.mrb[0].mxu0
      %v649 = vadd.f32 %v451, %v648
      %650 = vdwg.mxu0
      %v651 = vlaneseq
      %v652 = vshrl.u32 %v651, 7
      %v653 = vadd.s32 %v652, 8
      %v654 = vadd.s32 %v652, 16
      %v655 = vadd.s32 %v652, 24
      %v656 = vadd.s32 %v652, 32
      %v657 = vadd.s32 %v652, 40
      %v658 = vadd.s32 %v652, 48
      %v659 = vadd.s32 %v652, 56
      %v660 = vadd.s32 %v652, 64
      %v661 = vadd.s32 %v652, 72
      %v662 = vadd.s32 %v652, 80
      %v663 = vadd.s32 %v652, 88
      %v664 = vadd.s32 %v652, 96
      %v665 = vadd.s32 %v652, 104
      %v666 = vadd.s32 %v652, 112
      %v667 = vadd.s32 %v652, 120
      %v668 = vlaneseq
      %v669 = vand.u32 %v668, 127
      %v670 = vadd.s32 %v669, 128
      %v671 = vmax.f32 %v573, %v583
      %v672 = vmax.f32 %v577, %v587
      %v673 = vmax.f32 %v671, %v593
      %v674 = vmax.f32 %v672, %v597
      %v675 = vmax.f32 %v673, %v603
      %v676 = vmax.f32 %v674, %v607
      %v677 = vmax.f32 %v675, %v613
      %v678 = vmax.f32 %v676, %v617
      %v679 = vmax.f32 %v677, %v623
      %v680 = vmax.f32 %v678, %v627
      %v681 = vmax.f32 %v679, %v633
      %v682 = vmax.f32 %v680, %v637
      %v683 = vmax.f32 %v681, %v643
      %v684 = vmax.f32 %v682, %v647
      %v685 = vmax.f32 %v683, %v684
      %v686 = vrot.slane %v685, 4
      %v687 = vmax.f32 %v685, %v686
      %v688 = vrot.slane %v687, 2
      %v689 = vmax.f32 %v687, %v688
      %v690 = vrot.slane %v689, 1
      %v691 = vmax.f32 %v689, %v690
      %v692 = vmax.f32 %v575, %v585
      %v693 = vmax.f32 %v579, %v589
      %v694 = vmax.f32 %v692, %v595
      %v695 = vmax.f32 %v693, %v599
      %v696 = vmax.f32 %v694, %v605
      %v697 = vmax.f32 %v695, %v609
      %v698 = vmax.f32 %v696, %v615
      %v699 = vmax.f32 %v697, %v619
      %v700 = vmax.f32 %v698, %v625
      %v701 = vmax.f32 %v699, %v629
      %v702 = vmax.f32 %v700, %v635
      %v703 = vmax.f32 %v701, %v639
      %v704 = vmax.f32 %v702, %v645
      %v705 = vmax.f32 %v703, %v649
      %v706 = vmax.f32 %v704, %v705
      %v707 = vrot.slane %v706, 4
      %v708 = vmax.f32 %v706, %v707
      %v709 = vrot.slane %v708, 2
      %v710 = vmax.f32 %v708, %v709
      %v711 = vrot.slane %v710, 1
      %v712 = vmax.f32 %v710, %v711
      %v713 = vsub.f32 %v573, %v691
      %v714 = vsub.f32 %v575, %v712
      %v715 = vsub.f32 %v577, %v691
      %v716 = vsub.f32 %v579, %v712
      %v717 = vsub.f32 %v583, %v691
      %v718 = vsub.f32 %v585, %v712
      %v719 = vsub.f32 %v587, %v691
      %v720 = vsub.f32 %v589, %v712
      %v721 = vsub.f32 %v593, %v691
      %v722 = vsub.f32 %v595, %v712
      %v723 = vsub.f32 %v597, %v691
      %v724 = vsub.f32 %v599, %v712
      %v725 = vsub.f32 %v603, %v691
      %v726 = vsub.f32 %v605, %v712
      %v727 = vsub.f32 %v607, %v691
      %v728 = vsub.f32 %v609, %v712
      %v729 = vsub.f32 %v613, %v691
      %v730 = vsub.f32 %v615, %v712
      %v731 = vsub.f32 %v617, %v691
      %v732 = vsub.f32 %v619, %v712
      %v733 = vsub.f32 %v623, %v691
      %v734 = vsub.f32 %v625, %v712
      %v735 = vsub.f32 %v627, %v691
      %v736 = vsub.f32 %v629, %v712
      %v737 = vsub.f32 %v633, %v691
      %v738 = vsub.f32 %v635, %v712
      %v739 = vsub.f32 %v637, %v691
      %v740 = vsub.f32 %v639, %v712
      %v741 = vsub.f32 %v643, %v691
      %v742 = vsub.f32 %v645, %v712
      %v743 = vsub.f32 %v647, %v691
      %v744 = vsub.f32 %v649, %v712
      %v745 = vmul.f32 %v713, 1.442695
      %v746 = vpow.pop %v745
      %v747 = vmul.f32 %v714, 1.442695
      %v748 = vpow.pop %v747
      %v749 = vmul.f32 %v715, 1.442695
      %v750 = vpow.pop %v749
      %v751 = vmul.f32 %v716, 1.442695
      %v752 = vpow.pop %v751
      %v753 = vmul.f32 %v717, 1.442695
      %v754 = vpow.pop %v753
      %v755 = vmul.f32 %v718, 1.442695
      %v756 = vpow.pop %v755
      %v757 = vmul.f32 %v719, 1.442695
      %v758 = vpow.pop %v757
      %v759 = vmul.f32 %v720, 1.442695
      %v760 = vpow.pop %v759
      %v761 = vmul.f32 %v721, 1.442695
      %v762 = vpow.pop %v761
      %v763 = vmul.f32 %v722, 1.442695
      %v764 = vpow.pop %v763
      %v765 = vmul.f32 %v723, 1.442695
      %v766 = vpow.pop %v765
      %v767 = vmul.f32 %v724, 1.442695
      %v768 = vpow.pop %v767
      %v769 = vmul.f32 %v725, 1.442695
      %v770 = vpow.pop %v769
      %v771 = vmul.f32 %v726, 1.442695
      %v772 = vpow.pop %v771
      %v773 = vmul.f32 %v727, 1.442695
      %v774 = vpow.pop %v773
      %v775 = vmul.f32 %v728, 1.442695
      %v776 = vpow.pop %v775
      %v777 = vmul.f32 %v729, 1.442695
      %v778 = vpow.pop %v777
      %v779 = vmul.f32 %v730, 1.442695
      %v780 = vpow.pop %v779
      %v781 = vmul.f32 %v731, 1.442695
      %v782 = vpow.pop %v781
      %v783 = vmul.f32 %v732, 1.442695
      %v784 = vpow.pop %v783
      %v785 = vmul.f32 %v733, 1.442695
      %v786 = vpow.pop %v785
      %v787 = vmul.f32 %v734, 1.442695
      %v788 = vpow.pop %v787
      %v789 = vmul.f32 %v735, 1.442695
      %v790 = vpow.pop %v789
      %v791 = vmul.f32 %v736, 1.442695
      %v792 = vpow.pop %v791
      %v793 = vmul.f32 %v737, 1.442695
      %v794 = vpow.pop %v793
      %v795 = vmul.f32 %v738, 1.442695
      %v796 = vpow.pop %v795
      %v797 = vmul.f32 %v739, 1.442695
      %v798 = vpow.pop %v797
      %v799 = vmul.f32 %v740, 1.442695
      %v800 = vpow.pop %v799
      %v801 = vmul.f32 %v741, 1.442695
      %v802 = vpow.pop %v801
      %v803 = vmul.f32 %v742, 1.442695
      %v804 = vpow.pop %v803
      %v805 = vmul.f32 %v743, 1.442695
      %v806 = vpow.pop %v805
      %v807 = vmul.f32 %v744, 1.442695
      %v808 = vpow.pop %v807
      %s809 = smul.u32 %s24, 256
      %s810 = smul.u32 %s25, 256
      %s811 = sadd.s32 %s809, %s810
      %v812 = vstv %s811
      %v813 = vadd.s32 %v812, %v669
      %v814 = vadd.s32 %v812, %v670
      %v815 = vmul.u32 %v813, 128
      %v816 = vmul.u32 %v814, 128
      %v817 = vadd.s32 %v815, %v652
      %v818 = vadd.s32 %v816, %v652
      %v819 = vadd.s32 %v815, %v653
      %v820 = vadd.s32 %v816, %v653
      %v821 = vadd.s32 %v815, %v654
      %v822 = vadd.s32 %v816, %v654
      %v823 = vadd.s32 %v815, %v655
      %v824 = vadd.s32 %v816, %v655
      %v825 = vadd.s32 %v815, %v656
      %v826 = vadd.s32 %v816, %v656
      %v827 = vadd.s32 %v815, %v657
      %v828 = vadd.s32 %v816, %v657
      %v829 = vadd.s32 %v815, %v658
      %v830 = vadd.s32 %v816, %v658
      %v831 = vadd.s32 %v815, %v659
      %v832 = vadd.s32 %v816, %v659
      %v833 = vadd.s32 %v815, %v660
      %v834 = vadd.s32 %v816, %v660
      %v835 = vadd.s32 %v815, %v661
      %v836 = vadd.s32 %v816, %v661
      %v837 = vadd.s32 %v815, %v662
      %v838 = vadd.s32 %v816, %v662
      %v839 = vadd.s32 %v815, %v663
      %v840 = vadd.s32 %v816, %v663
      %v841 = vadd.s32 %v815, %v664
      %v842 = vadd.s32 %v816, %v664
      %v843 = vadd.s32 %v815, %v665
      %v844 = vadd.s32 %v816, %v665
      %v845 = vadd.s32 %v815, %v666
      %v846 = vadd.s32 %v816, %v666
      %v847 = vadd.s32 %v815, %v667
      %v848 = vadd.s32 %v816, %v667
      %s849 = sld [smem:[#allocation3]]
      %s850 = smul.u32 %s849, 2654435769
      %v851 = vstv %s850
      %v852 = vadd.s32 %v817, %v851
      %v853 = vadd.s32 %v818, %v851
      %v854 = vadd.s32 %v819, %v851
      %v855 = vadd.s32 %v820, %v851
      %v856 = vadd.s32 %v821, %v851
      %v857 = vadd.s32 %v822, %v851
      %v858 = vadd.s32 %v823, %v851
      %v859 = vadd.s32 %v824, %v851
      %v860 = vadd.s32 %v825, %v851
      %v861 = vadd.s32 %v826, %v851
      %v862 = vadd.s32 %v827, %v851
      %v863 = vadd.s32 %v828, %v851
      %v864 = vadd.s32 %v829, %v851
      %v865 = vadd.s32 %v830, %v851
      %v866 = vadd.s32 %v831, %v851
      %v867 = vadd.s32 %v832, %v851
      %v868 = vadd.s32 %v833, %v851
      %v869 = vadd.s32 %v834, %v851
      %v870 = vadd.s32 %v835, %v851
      %v871 = vadd.s32 %v836, %v851
      %v872 = vadd.s32 %v837, %v851
      %v873 = vadd.s32 %v838, %v851
      %v874 = vadd.s32 %v839, %v851
      %v875 = vadd.s32 %v840, %v851
      %v876 = vadd.s32 %v841, %v851
      %v877 = vadd.s32 %v842, %v851
      %v878 = vadd.s32 %v843, %v851
      %v879 = vadd.s32 %v844, %v851
      %v880 = vadd.s32 %v845, %v851
      %v881 = vadd.s32 %v846, %v851
      %v882 = vadd.s32 %v847, %v851
      %v883 = vadd.s32 %v848, %v851
      %v884 = vshrl.u32 %v852, 16
      %v885 = vshrl.u32 %v853, 16
      %v886 = vshrl.u32 %v854, 16
      %v887 = vshrl.u32 %v855, 16
      %v888 = vshrl.u32 %v856, 16
      %v889 = vshrl.u32 %v857, 16
      %v890 = vshrl.u32 %v858, 16
      %v891 = vshrl.u32 %v859, 16
      %v892 = vshrl.u32 %v860, 16
      %v893 = vshrl.u32 %v861, 16
      %v894 = vshrl.u32 %v862, 16
      %v895 = vshrl.u32 %v863, 16
      %v896 = vshrl.u32 %v864, 16
      %v897 = vshrl.u32 %v865, 16
      %v898 = vshrl.u32 %v866, 16
      %v899 = vshrl.u32 %v867, 16
      %v900 = vshrl.u32 %v868, 16
      %v901 = vshrl.u32 %v869, 16
      %v902 = vshrl.u32 %v870, 16
      %v903 = vshrl.u32 %v871, 16
      %v904 = vshrl.u32 %v872, 16
      %v905 = vshrl.u32 %v873, 16
      %v906 = vshrl.u32 %v874, 16
      %v907 = vshrl.u32 %v875, 16
      %v908 = vshrl.u32 %v876, 16
      %v909 = vshrl.u32 %v877, 16
      %v910 = vshrl.u32 %v878, 16
      %v911 = vshrl.u32 %v879, 16
      %v912 = vshrl.u32 %v880, 16
      %v913 = vshrl.u32 %v881, 16
      %v914 = vshrl.u32 %v882, 16
      %v915 = vshrl.u32 %v883, 16
      %v916 = vxor.u32 %v852, %v884
      %v917 = vxor.u32 %v853, %v885
      %v918 = vxor.u32 %v854, %v886
      %v919 = vxor.u32 %v855, %v887
      %v920 = vxor.u32 %v856, %v888
      %v921 = vxor.u32 %v857, %v889
      %v922 = vxor.u32 %v858, %v890
      %v923 = vxor.u32 %v859, %v891
      %v924 = vxor.u32 %v860, %v892
      %v925 = vxor.u32 %v861, %v893
      %v926 = vxor.u32 %v862, %v894
      %v927 = vxor.u32 %v863, %v895
      %v928 = vxor.u32 %v864, %v896
      %v929 = vxor.u32 %v865, %v897
      %v930 = vxor.u32 %v866, %v898
      %v931 = vxor.u32 %v867, %v899
      %v932 = vxor.u32 %v868, %v900
      %v933 = vxor.u32 %v869, %v901
      %v934 = vxor.u32 %v870, %v902
      %v935 = vxor.u32 %v871, %v903
      %v936 = vxor.u32 %v872, %v904
      %v937 = vxor.u32 %v873, %v905
      %v938 = vxor.u32 %v874, %v906
      %v939 = vxor.u32 %v875, %v907
      %v940 = vxor.u32 %v876, %v908
      %v941 = vxor.u32 %v877, %v909
      %v942 = vxor.u32 %v878, %v910
      %v943 = vxor.u32 %v879, %v911
      %v944 = vxor.u32 %v880, %v912
      %v945 = vxor.u32 %v881, %v913
      %v946 = vxor.u32 %v882, %v914
      %v947 = vxor.u32 %v883, %v915
      %v948 = vmul.u32 %v916, 2146121005
      %v949 = vmul.u32 %v917, 2146121005
      %v950 = vmul.u32 %v918, 2146121005
      %v951 = vmul.u32 %v919, 2146121005
      %v952 = vmul.u32 %v920, 2146121005
      %v953 = vmul.u32 %v921, 2146121005
      %v954 = vmul.u32 %v922, 2146121005
      %v955 = vmul.u32 %v923, 2146121005
      %v956 = vmul.u32 %v924, 2146121005
      %v957 = vmul.u32 %v925, 2146121005
      %v958 = vmul.u32 %v926, 2146121005
      %v959 = vmul.u32 %v927, 2146121005
      %v960 = vmul.u32 %v928, 2146121005
      %v961 = vmul.u32 %v929, 2146121005
      %v962 = vmul.u32 %v930, 2146121005
      %v963 = vmul.u32 %v931, 2146121005
      %v964 = vmul.u32 %v932, 2146121005
      %v965 = vmul.u32 %v933, 2146121005
      %v966 = vmul.u32 %v934, 2146121005
      %v967 = vmul.u32 %v935, 2146121005
      %v968 = vmul.u32 %v936, 2146121005
      %v969 = vmul.u32 %v937, 2146121005
      %v970 = vmul.u32 %v938, 2146121005
      %v971 = vmul.u32 %v939, 2146121005
      %v972 = vmul.u32 %v940, 2146121005
      %v973 = vmul.u32 %v941, 2146121005
      %v974 = vmul.u32 %v942, 2146121005
      %v975 = vmul.u32 %v943, 2146121005
      %v976 = vmul.u32 %v944, 2146121005
      %v977 = vmul.u32 %v945, 2146121005
      %v978 = vmul.u32 %v946, 2146121005
      %v979 = vmul.u32 %v947, 2146121005
      %v980 = vshrl.u32 %v948, 15
      %v981 = vshrl.u32 %v949, 15
      %v982 = vshrl.u32 %v950, 15
      %v983 = vshrl.u32 %v951, 15
      %v984 = vshrl.u32 %v952, 15
      %v985 = vshrl.u32 %v953, 15
      %v986 = vshrl.u32 %v954, 15
      %v987 = vshrl.u32 %v955, 15
      %v988 = vshrl.u32 %v956, 15
      %v989 = vshrl.u32 %v957, 15
      %v990 = vshrl.u32 %v958, 15
      %v991 = vshrl.u32 %v959, 15
      %v992 = vshrl.u32 %v960, 15
      %v993 = vshrl.u32 %v961, 15
      %v994 = vshrl.u32 %v962, 15
      %v995 = vshrl.u32 %v963, 15
      %v996 = vshrl.u32 %v964, 15
      %v997 = vshrl.u32 %v965, 15
      %v998 = vshrl.u32 %v966, 15
      %v999 = vshrl.u32 %v967, 15
      %v1000 = vshrl.u32 %v968, 15
      %v1001 = vshrl.u32 %v969, 15
      %v1002 = vshrl.u32 %v970, 15
      %v1003 = vshrl.u32 %v971, 15
      %v1004 = vshrl.u32 %v972, 15
      %v1005 = vshrl.u32 %v973, 15
      %v1006 = vshrl.u32 %v974, 15
      %v1007 = vshrl.u32 %v975, 15
      %v1008 = vshrl.u32 %v976, 15
      %v1009 = vshrl.u32 %v977, 15
      %v1010 = vshrl.u32 %v978, 15
      %v1011 = vshrl.u32 %v979, 15
      %v1012 = vxor.u32 %v948, %v980
      %v1013 = vxor.u32 %v949, %v981
      %v1014 = vxor.u32 %v950, %v982
      %v1015 = vxor.u32 %v951, %v983
      %v1016 = vxor.u32 %v952, %v984
      %v1017 = vxor.u32 %v953, %v985
      %v1018 = vxor.u32 %v954, %v986
      %v1019 = vxor.u32 %v955, %v987
      %v1020 = vxor.u32 %v956, %v988
      %v1021 = vxor.u32 %v957, %v989
      %v1022 = vxor.u32 %v958, %v990
      %v1023 = vxor.u32 %v959, %v991
      %v1024 = vxor.u32 %v960, %v992
      %v1025 = vxor.u32 %v961, %v993
      %v1026 = vxor.u32 %v962, %v994
      %v1027 = vxor.u32 %v963, %v995
      %v1028 = vxor.u32 %v964, %v996
      %v1029 = vxor.u32 %v965, %v997
      %v1030 = vxor.u32 %v966, %v998
      %v1031 = vxor.u32 %v967, %v999
      %v1032 = vxor.u32 %v968, %v1000
      %v1033 = vxor.u32 %v969, %v1001
      %v1034 = vxor.u32 %v970, %v1002
      %v1035 = vxor.u32 %v971, %v1003
      %v1036 = vxor.u32 %v972, %v1004
      %v1037 = vxor.u32 %v973, %v1005
      %v1038 = vxor.u32 %v974, %v1006
      %v1039 = vxor.u32 %v975, %v1007
      %v1040 = vxor.u32 %v976, %v1008
      %v1041 = vxor.u32 %v977, %v1009
      %v1042 = vxor.u32 %v978, %v1010
      %v1043 = vxor.u32 %v979, %v1011
      %v1044 = vmul.u32 %v1012, 2221713035
      %v1045 = vmul.u32 %v1013, 2221713035
      %v1046 = vmul.u32 %v1014, 2221713035
      %v1047 = vmul.u32 %v1015, 2221713035
      %v1048 = vmul.u32 %v1016, 2221713035
      %v1049 = vmul.u32 %v1017, 2221713035
      %v1050 = vmul.u32 %v1018, 2221713035
      %v1051 = vmul.u32 %v1019, 2221713035
      %v1052 = vmul.u32 %v1020, 2221713035
      %v1053 = vmul.u32 %v1021, 2221713035
      %v1054 = vmul.u32 %v1022, 2221713035
      %v1055 = vmul.u32 %v1023, 2221713035
      %v1056 = vmul.u32 %v1024, 2221713035
      %v1057 = vmul.u32 %v1025, 2221713035
      %v1058 = vmul.u32 %v1026, 2221713035
      %v1059 = vmul.u32 %v1027, 2221713035
      %v1060 = vmul.u32 %v1028, 2221713035
      %v1061 = vmul.u32 %v1029, 2221713035
      %v1062 = vmul.u32 %v1030, 2221713035
      %v1063 = vmul.u32 %v1031, 2221713035
      %v1064 = vmul.u32 %v1032, 2221713035
      %v1065 = vmul.u32 %v1033, 2221713035
      %v1066 = vmul.u32 %v1034, 2221713035
      %v1067 = vmul.u32 %v1035, 2221713035
      %v1068 = vmul.u32 %v1036, 2221713035
      %v1069 = vmul.u32 %v1037, 2221713035
      %v1070 = vmul.u32 %v1038, 2221713035
      %v1071 = vmul.u32 %v1039, 2221713035
      %v1072 = vmul.u32 %v1040, 2221713035
      %v1073 = vmul.u32 %v1041, 2221713035
      %v1074 = vmul.u32 %v1042, 2221713035
      %v1075 = vmul.u32 %v1043, 2221713035
      %v1076 = vshrl.u32 %v1044, 16
      %v1077 = vshrl.u32 %v1045, 16
      %v1078 = vshrl.u32 %v1046, 16
      %v1079 = vshrl.u32 %v1047, 16
      %v1080 = vshrl.u32 %v1048, 16
      %v1081 = vshrl.u32 %v1049, 16
      %v1082 = vshrl.u32 %v1050, 16
      %v1083 = vshrl.u32 %v1051, 16
      %v1084 = vshrl.u32 %v1052, 16
      %v1085 = vshrl.u32 %v1053, 16
      %v1086 = vshrl.u32 %v1054, 16
      %v1087 = vshrl.u32 %v1055, 16
      %v1088 = vshrl.u32 %v1056, 16
      %v1089 = vshrl.u32 %v1057, 16
      %v1090 = vshrl.u32 %v1058, 16
      %v1091 = vshrl.u32 %v1059, 16
      %v1092 = vshrl.u32 %v1060, 16
      %v1093 = vshrl.u32 %v1061, 16
      %v1094 = vshrl.u32 %v1062, 16
      %v1095 = vshrl.u32 %v1063, 16
      %v1096 = vshrl.u32 %v1064, 16
      %v1097 = vshrl.u32 %v1065, 16
      %v1098 = vshrl.u32 %v1066, 16
      %v1099 = vshrl.u32 %v1067, 16
      %v1100 = vshrl.u32 %v1068, 16
      %v1101 = vshrl.u32 %v1069, 16
      %v1102 = vshrl.u32 %v1070, 16
      %v1103 = vshrl.u32 %v1071, 16
      %v1104 = vshrl.u32 %v1072, 16
      %v1105 = vshrl.u32 %v1073, 16
      %v1106 = vshrl.u32 %v1074, 16
      %v1107 = vshrl.u32 %v1075, 16
      %v1108 = vxor.u32 %v1044, %v1076
      %v1109 = vxor.u32 %v1045, %v1077
      %v1110 = vxor.u32 %v1046, %v1078
      %v1111 = vxor.u32 %v1047, %v1079
      %v1112 = vxor.u32 %v1048, %v1080
      %v1113 = vxor.u32 %v1049, %v1081
      %v1114 = vxor.u32 %v1050, %v1082
      %v1115 = vxor.u32 %v1051, %v1083
      %v1116 = vxor.u32 %v1052, %v1084
      %v1117 = vxor.u32 %v1053, %v1085
      %v1118 = vxor.u32 %v1054, %v1086
      %v1119 = vxor.u32 %v1055, %v1087
      %v1120 = vxor.u32 %v1056, %v1088
      %v1121 = vxor.u32 %v1057, %v1089
      %v1122 = vxor.u32 %v1058, %v1090
      %v1123 = vxor.u32 %v1059, %v1091
      %v1124 = vxor.u32 %v1060, %v1092
      %v1125 = vxor.u32 %v1061, %v1093
      %v1126 = vxor.u32 %v1062, %v1094
      %v1127 = vxor.u32 %v1063, %v1095
      %v1128 = vxor.u32 %v1064, %v1096
      %v1129 = vxor.u32 %v1065, %v1097
      %v1130 = vxor.u32 %v1066, %v1098
      %v1131 = vxor.u32 %v1067, %v1099
      %v1132 = vxor.u32 %v1068, %v1100
      %v1133 = vxor.u32 %v1069, %v1101
      %v1134 = vxor.u32 %v1070, %v1102
      %v1135 = vxor.u32 %v1071, %v1103
      %v1136 = vxor.u32 %v1072, %v1104
      %v1137 = vxor.u32 %v1073, %v1105
      %v1138 = vxor.u32 %v1074, %v1106
      %v1139 = vxor.u32 %v1075, %v1107
      %v1140 = vshrl.u32 %v1108, 9
      %v1141 = vshrl.u32 %v1109, 9
      %v1142 = vshrl.u32 %v1110, 9
      %v1143 = vshrl.u32 %v1111, 9
      %v1144 = vshrl.u32 %v1112, 9
      %v1145 = vshrl.u32 %v1113, 9
      %v1146 = vshrl.u32 %v1114, 9
      %v1147 = vshrl.u32 %v1115, 9
      %v1148 = vshrl.u32 %v1116, 9
      %v1149 = vshrl.u32 %v1117, 9
      %v1150 = vshrl.u32 %v1118, 9
      %v1151 = vshrl.u32 %v1119, 9
      %v1152 = vshrl.u32 %v1120, 9
      %v1153 = vshrl.u32 %v1121, 9
      %v1154 = vshrl.u32 %v1122, 9
      %v1155 = vshrl.u32 %v1123, 9
      %v1156 = vshrl.u32 %v1124, 9
      %v1157 = vshrl.u32 %v1125, 9
      %v1158 = vshrl.u32 %v1126, 9
      %v1159 = vshrl.u32 %v1127, 9
      %v1160 = vshrl.u32 %v1128, 9
      %v1161 = vshrl.u32 %v1129, 9
      %v1162 = vshrl.u32 %v1130, 9
      %v1163 = vshrl.u32 %v1131, 9
      %v1164 = vshrl.u32 %v1132, 9
      %v1165 = vshrl.u32 %v1133, 9
      %v1166 = vshrl.u32 %v1134, 9
      %v1167 = vshrl.u32 %v1135, 9
      %v1168 = vshrl.u32 %v1136, 9
      %v1169 = vshrl.u32 %v1137, 9
      %v1170 = vshrl.u32 %v1138, 9
      %v1171 = vshrl.u32 %v1139, 9
      %v1172 = vor.u32 %v1140, 1065353216
      %v1173 = vor.u32 %v1141, 1065353216
      %v1174 = vor.u32 %v1142, 1065353216
      %v1175 = vor.u32 %v1143, 1065353216
      %v1176 = vor.u32 %v1144, 1065353216
      %v1177 = vor.u32 %v1145, 1065353216
      %v1178 = vor.u32 %v1146, 1065353216
      %v1179 = vor.u32 %v1147, 1065353216
      %v1180 = vor.u32 %v1148, 1065353216
      %v1181 = vor.u32 %v1149, 1065353216
      %v1182 = vor.u32 %v1150, 1065353216
      %v1183 = vor.u32 %v1151, 1065353216
      %v1184 = vor.u32 %v1152, 1065353216
      %v1185 = vor.u32 %v1153, 1065353216
      %v1186 = vor.u32 %v1154, 1065353216
      %v1187 = vor.u32 %v1155, 1065353216
      %v1188 = vor.u32 %v1156, 1065353216
      %v1189 = vor.u32 %v1157, 1065353216
      %v1190 = vor.u32 %v1158, 1065353216
      %v1191 = vor.u32 %v1159, 1065353216
      %v1192 = vor.u32 %v1160, 1065353216
      %v1193 = vor.u32 %v1161, 1065353216
      %v1194 = vor.u32 %v1162, 1065353216
      %v1195 = vor.u32 %v1163, 1065353216
      %v1196 = vor.u32 %v1164, 1065353216
      %v1197 = vor.u32 %v1165, 1065353216
      %v1198 = vor.u32 %v1166, 1065353216
      %v1199 = vor.u32 %v1167, 1065353216
      %v1200 = vor.u32 %v1168, 1065353216
      %v1201 = vor.u32 %v1169, 1065353216
      %v1202 = vor.u32 %v1170, 1065353216
      %v1203 = vor.u32 %v1171, 1065353216
      %v1236 = vsub.f32 %v1172, 1.0
      %v1237 = vsub.f32 %v1173, 1.0
      %v1238 = vsub.f32 %v1174, 1.0
      %v1239 = vsub.f32 %v1175, 1.0
      %v1240 = vsub.f32 %v1176, 1.0
      %v1241 = vsub.f32 %v1177, 1.0
      %v1242 = vsub.f32 %v1178, 1.0
      %v1243 = vsub.f32 %v1179, 1.0
      %v1244 = vsub.f32 %v1180, 1.0
      %v1245 = vsub.f32 %v1181, 1.0
      %v1246 = vsub.f32 %v1182, 1.0
      %v1247 = vsub.f32 %v1183, 1.0
      %v1248 = vsub.f32 %v1184, 1.0
      %v1249 = vsub.f32 %v1185, 1.0
      %v1250 = vsub.f32 %v1186, 1.0
      %v1251 = vsub.f32 %v1187, 1.0
      %v1252 = vsub.f32 %v1188, 1.0
      %v1253 = vsub.f32 %v1189, 1.0
      %v1254 = vsub.f32 %v1190, 1.0
      %v1255 = vsub.f32 %v1191, 1.0
      %v1256 = vsub.f32 %v1192, 1.0
      %v1257 = vsub.f32 %v1193, 1.0
      %v1258 = vsub.f32 %v1194, 1.0
      %v1259 = vsub.f32 %v1195, 1.0
      %v1260 = vsub.f32 %v1196, 1.0
      %v1261 = vsub.f32 %v1197, 1.0
      %v1262 = vsub.f32 %v1198, 1.0
      %v1263 = vsub.f32 %v1199, 1.0
      %v1264 = vsub.f32 %v1200, 1.0
      %v1265 = vsub.f32 %v1201, 1.0
      %v1266 = vsub.f32 %v1202, 1.0
      %v1267 = vsub.f32 %v1203, 1.0
      %v1268 = vmax.f32 %v1236, 1e-12
      %v1269 = vmax.f32 %v1237, 1e-12
      %v1270 = vmax.f32 %v1238, 1e-12
      %v1271 = vmax.f32 %v1239, 1e-12
      %v1272 = vmax.f32 %v1240, 1e-12
      %v1273 = vmax.f32 %v1241, 1e-12
      %v1274 = vmax.f32 %v1242, 1e-12
      %v1275 = vmax.f32 %v1243, 1e-12
      %v1276 = vmax.f32 %v1244, 1e-12
      %v1277 = vmax.f32 %v1245, 1e-12
      %v1278 = vmax.f32 %v1246, 1e-12
      %v1279 = vmax.f32 %v1247, 1e-12
      %v1280 = vmax.f32 %v1248, 1e-12
      %v1281 = vmax.f32 %v1249, 1e-12
      %v1282 = vmax.f32 %v1250, 1e-12
      %v1283 = vmax.f32 %v1251, 1e-12
      %v1284 = vmax.f32 %v1252, 1e-12
      %v1285 = vmax.f32 %v1253, 1e-12
      %v1286 = vmax.f32 %v1254, 1e-12
      %v1287 = vmax.f32 %v1255, 1e-12
      %v1288 = vmax.f32 %v1256, 1e-12
      %v1289 = vmax.f32 %v1257, 1e-12
      %v1290 = vmax.f32 %v1258, 1e-12
      %v1291 = vmax.f32 %v1259, 1e-12
      %v1292 = vmax.f32 %v1260, 1e-12
      %v1293 = vmax.f32 %v1261, 1e-12
      %v1294 = vmax.f32 %v1262, 1e-12
      %v1295 = vmax.f32 %v1263, 1e-12
      %v1296 = vmax.f32 %v1264, 1e-12
      %v1297 = vmax.f32 %v1265, 1e-12
      %v1298 = vmax.f32 %v1266, 1e-12
      %v1299 = vmax.f32 %v1267, 1e-12
      %v1300 = vlog2.pop %v1268
      %v1301 = vmul.f32 %v1300, 0.6931472
      %v1302 = vlog2.pop %v1269
      %v1303 = vmul.f32 %v1302, 0.6931472
      %v1304 = vlog2.pop %v1270
      %v1305 = vmul.f32 %v1304, 0.6931472
      %v1306 = vlog2.pop %v1271
      %v1307 = vmul.f32 %v1306, 0.6931472
      %v1308 = vlog2.pop %v1272
      %v1309 = vmul.f32 %v1308, 0.6931472
      %v1310 = vlog2.pop %v1273
      %v1311 = vmul.f32 %v1310, 0.6931472
      %v1312 = vlog2.pop %v1274
      %v1313 = vmul.f32 %v1312, 0.6931472
      %v1314 = vlog2.pop %v1275
      %v1315 = vmul.f32 %v1314, 0.6931472
      %v1316 = vlog2.pop %v1276
      %v1317 = vmul.f32 %v1316, 0.6931472
      %v1318 = vlog2.pop %v1277
      %v1319 = vmul.f32 %v1318, 0.6931472
      %v1320 = vlog2.pop %v1278
      %v1321 = vmul.f32 %v1320, 0.6931472
      %v1322 = vlog2.pop %v1279
      %v1323 = vmul.f32 %v1322, 0.6931472
      %v1324 = vlog2.pop %v1280
      %v1325 = vmul.f32 %v1324, 0.6931472
      %v1326 = vlog2.pop %v1281
      %v1327 = vmul.f32 %v1326, 0.6931472
      %v1328 = vlog2.pop %v1282
      %v1329 = vmul.f32 %v1328, 0.6931472
      %v1330 = vlog2.pop %v1283
      %v1331 = vmul.f32 %v1330, 0.6931472
      %v1332 = vlog2.pop %v1284
      %v1333 = vmul.f32 %v1332, 0.6931472
      %v1334 = vlog2.pop %v1285
      %v1335 = vmul.f32 %v1334, 0.6931472
      %v1336 = vlog2.pop %v1286
      %v1337 = vmul.f32 %v1336, 0.6931472
      %v1338 = vlog2.pop %v1287
      %v1339 = vmul.f32 %v1338, 0.6931472
      %v1340 = vlog2.pop %v1288
      %v1341 = vmul.f32 %v1340, 0.6931472
      %v1342 = vlog2.pop %v1289
      %v1343 = vmul.f32 %v1342, 0.6931472
      %v1344 = vlog2.pop %v1290
      %v1345 = vmul.f32 %v1344, 0.6931472
      %v1346 = vlog2.pop %v1291
      %v1347 = vmul.f32 %v1346, 0.6931472
      %v1348 = vlog2.pop %v1292
      %v1349 = vmul.f32 %v1348, 0.6931472
      %v1350 = vlog2.pop %v1293
      %v1351 = vmul.f32 %v1350, 0.6931472
      %v1352 = vlog2.pop %v1294
      %v1353 = vmul.f32 %v1352, 0.6931472
      %v1354 = vlog2.pop %v1295
      %v1355 = vmul.f32 %v1354, 0.6931472
      %v1356 = vlog2.pop %v1296
      %v1357 = vmul.f32 %v1356, 0.6931472
      %v1358 = vlog2.pop %v1297
      %v1359 = vmul.f32 %v1358, 0.6931472
      %v1360 = vlog2.pop %v1298
      %v1361 = vmul.f32 %v1360, 0.6931472
      %v1362 = vlog2.pop %v1299
      %v1363 = vmul.f32 %v1362, 0.6931472
      %v1364 = vsub.f32 0.0, %v1301
      %v1365 = vsub.f32 0.0, %v1303
      %v1366 = vsub.f32 0.0, %v1305
      %v1367 = vsub.f32 0.0, %v1307
      %v1368 = vsub.f32 0.0, %v1309
      %v1369 = vsub.f32 0.0, %v1311
      %v1370 = vsub.f32 0.0, %v1313
      %v1371 = vsub.f32 0.0, %v1315
      %v1372 = vsub.f32 0.0, %v1317
      %v1373 = vsub.f32 0.0, %v1319
      %v1374 = vsub.f32 0.0, %v1321
      %v1375 = vsub.f32 0.0, %v1323
      %v1376 = vsub.f32 0.0, %v1325
      %v1377 = vsub.f32 0.0, %v1327
      %v1378 = vsub.f32 0.0, %v1329
      %v1379 = vsub.f32 0.0, %v1331
      %v1380 = vsub.f32 0.0, %v1333
      %v1381 = vsub.f32 0.0, %v1335
      %v1382 = vsub.f32 0.0, %v1337
      %v1383 = vsub.f32 0.0, %v1339
      %v1384 = vsub.f32 0.0, %v1341
      %v1385 = vsub.f32 0.0, %v1343
      %v1386 = vsub.f32 0.0, %v1345
      %v1387 = vsub.f32 0.0, %v1347
      %v1388 = vsub.f32 0.0, %v1349
      %v1389 = vsub.f32 0.0, %v1351
      %v1390 = vsub.f32 0.0, %v1353
      %v1391 = vsub.f32 0.0, %v1355
      %v1392 = vsub.f32 0.0, %v1357
      %v1393 = vsub.f32 0.0, %v1359
      %v1394 = vsub.f32 0.0, %v1361
      %v1395 = vsub.f32 0.0, %v1363
      %v1396 = vrcp.pop %v1364
      %v1397 = vmul.f32 %v746, %v1396
      %v1398 = vrcp.pop %v1365
      %v1399 = vmul.f32 %v748, %v1398
      %v1400 = vrcp.pop %v1366
      %v1401 = vmul.f32 %v750, %v1400
      %v1402 = vrcp.pop %v1367
      %v1403 = vmul.f32 %v752, %v1402
      %v1404 = vrcp.pop %v1368
      %v1405 = vmul.f32 %v754, %v1404
      %v1406 = vrcp.pop %v1369
      %v1407 = vmul.f32 %v756, %v1406
      %v1408 = vrcp.pop %v1370
      %v1409 = vmul.f32 %v758, %v1408
      %v1410 = vrcp.pop %v1371
      %v1411 = vmul.f32 %v760, %v1410
      %v1412 = vrcp.pop %v1372
      %v1413 = vmul.f32 %v762, %v1412
      %v1414 = vrcp.pop %v1373
      %v1415 = vmul.f32 %v764, %v1414
      %v1416 = vrcp.pop %v1374
      %v1417 = vmul.f32 %v766, %v1416
      %v1418 = vrcp.pop %v1375
      %v1419 = vmul.f32 %v768, %v1418
      %v1420 = vrcp.pop %v1376
      %v1421 = vmul.f32 %v770, %v1420
      %v1422 = vrcp.pop %v1377
      %v1423 = vmul.f32 %v772, %v1422
      %v1424 = vrcp.pop %v1378
      %v1425 = vmul.f32 %v774, %v1424
      %v1426 = vrcp.pop %v1379
      %v1427 = vmul.f32 %v776, %v1426
      %v1428 = vrcp.pop %v1380
      %v1429 = vmul.f32 %v778, %v1428
      %v1430 = vrcp.pop %v1381
      %v1431 = vmul.f32 %v780, %v1430
      %v1432 = vrcp.pop %v1382
      %v1433 = vmul.f32 %v782, %v1432
      %v1434 = vrcp.pop %v1383
      %v1435 = vmul.f32 %v784, %v1434
      %v1436 = vrcp.pop %v1384
      %v1437 = vmul.f32 %v786, %v1436
      %v1438 = vrcp.pop %v1385
      %v1439 = vmul.f32 %v788, %v1438
      %v1440 = vrcp.pop %v1386
      %v1441 = vmul.f32 %v790, %v1440
      %v1442 = vrcp.pop %v1387
      %v1443 = vmul.f32 %v792, %v1442
      %v1444 = vrcp.pop %v1388
      %v1445 = vmul.f32 %v794, %v1444
      %v1446 = vrcp.pop %v1389
      %v1447 = vmul.f32 %v796, %v1446
      %v1448 = vrcp.pop %v1390
      %v1449 = vmul.f32 %v798, %v1448
      %v1450 = vrcp.pop %v1391
      %v1451 = vmul.f32 %v800, %v1450
      %v1452 = vrcp.pop %v1392
      %v1453 = vmul.f32 %v802, %v1452
      %v1454 = vrcp.pop %v1393
      %v1455 = vmul.f32 %v804, %v1454
      %v1456 = vrcp.pop %v1394
      %v1457 = vmul.f32 %v806, %v1456
      %v1458 = vrcp.pop %v1395
      %v1459 = vmul.f32 %v808, %v1458
      %v1460 = vmax.f32 %v1397, %v1405
      %v1461 = vmax.f32 %v1401, %v1409
      %v1462 = vmax.f32 %v1460, %v1413
      %v1463 = vmax.f32 %v1461, %v1417
      %v1464 = vmax.f32 %v1462, %v1421
      %v1465 = vmax.f32 %v1463, %v1425
      %v1466 = vmax.f32 %v1464, %v1429
      %v1467 = vmax.f32 %v1465, %v1433
      %v1468 = vmax.f32 %v1466, %v1437
      %v1469 = vmax.f32 %v1467, %v1441
      %v1470 = vmax.f32 %v1468, %v1445
      %v1471 = vmax.f32 %v1469, %v1449
      %v1472 = vmax.f32 %v1470, %v1453
      %v1473 = vmax.f32 %v1471, %v1457
      %v1474 = vmax.f32 %v1472, %v1473
      %v1475 = vrot.slane %v1474, 4
      %v1476 = vmax.f32 %v1474, %v1475
      %v1477 = vrot.slane %v1476, 2
      %v1478 = vmax.f32 %v1476, %v1477
      %v1479 = vrot.slane %v1478, 1
      %v1480 = vmax.f32 %v1478, %v1479
      %v1481 = vmax.f32 %v1399, %v1407
      %v1482 = vmax.f32 %v1403, %v1411
      %v1483 = vmax.f32 %v1481, %v1415
      %v1484 = vmax.f32 %v1482, %v1419
      %v1485 = vmax.f32 %v1483, %v1423
      %v1486 = vmax.f32 %v1484, %v1427
      %v1487 = vmax.f32 %v1485, %v1431
      %v1488 = vmax.f32 %v1486, %v1435
      %v1489 = vmax.f32 %v1487, %v1439
      %v1490 = vmax.f32 %v1488, %v1443
      %v1491 = vmax.f32 %v1489, %v1447
      %v1492 = vmax.f32 %v1490, %v1451
      %v1493 = vmax.f32 %v1491, %v1455
      %v1494 = vmax.f32 %v1492, %v1459
      %v1495 = vmax.f32 %v1493, %v1494
      %v1496 = vrot.slane %v1495, 4
      %v1497 = vmax.f32 %v1495, %v1496
      %v1498 = vrot.slane %v1497, 2
      %v1499 = vmax.f32 %v1497, %v1498
      %v1500 = vrot.slane %v1499, 1
      %v1501 = vmax.f32 %v1499, %v1500
      %vm1502 = vcmp.eq.f32.partialorder %v1397, %v1480
      %vm1503 = vcmp.eq.f32.partialorder %v1399, %v1501
      %vm1504 = vcmp.eq.f32.partialorder %v1401, %v1480
      %vm1505 = vcmp.eq.f32.partialorder %v1403, %v1501
      %vm1506 = vcmp.eq.f32.partialorder %v1405, %v1480
      %vm1507 = vcmp.eq.f32.partialorder %v1407, %v1501
      %vm1508 = vcmp.eq.f32.partialorder %v1409, %v1480
      %vm1509 = vcmp.eq.f32.partialorder %v1411, %v1501
      %vm1510 = vcmp.eq.f32.partialorder %v1413, %v1480
      %vm1511 = vcmp.eq.f32.partialorder %v1415, %v1501
      %vm1512 = vcmp.eq.f32.partialorder %v1417, %v1480
      %vm1513 = vcmp.eq.f32.partialorder %v1419, %v1501
      %vm1514 = vcmp.eq.f32.partialorder %v1421, %v1480
      %vm1515 = vcmp.eq.f32.partialorder %v1423, %v1501
      %vm1516 = vcmp.eq.f32.partialorder %v1425, %v1480
      %vm1517 = vcmp.eq.f32.partialorder %v1427, %v1501
      %vm1518 = vcmp.eq.f32.partialorder %v1429, %v1480
      %vm1519 = vcmp.eq.f32.partialorder %v1431, %v1501
      %vm1520 = vcmp.eq.f32.partialorder %v1433, %v1480
      %vm1521 = vcmp.eq.f32.partialorder %v1435, %v1501
      %vm1522 = vcmp.eq.f32.partialorder %v1437, %v1480
      %vm1523 = vcmp.eq.f32.partialorder %v1439, %v1501
      %vm1524 = vcmp.eq.f32.partialorder %v1441, %v1480
      %vm1525 = vcmp.eq.f32.partialorder %v1443, %v1501
      %vm1526 = vcmp.eq.f32.partialorder %v1445, %v1480
      %vm1527 = vcmp.eq.f32.partialorder %v1447, %v1501
      %vm1528 = vcmp.eq.f32.partialorder %v1449, %v1480
      %vm1529 = vcmp.eq.f32.partialorder %v1451, %v1501
      %vm1530 = vcmp.eq.f32.partialorder %v1453, %v1480
      %vm1531 = vcmp.eq.f32.partialorder %v1455, %v1501
      %vm1532 = vcmp.eq.f32.partialorder %v1457, %v1480
      %vm1533 = vcmp.eq.f32.partialorder %v1459, %v1501
      %v1534 = vsel %vm1502, %v652, 128
      %v1535 = vsel %vm1503, %v652, 128
      %v1536 = vsel %vm1504, %v653, 128
      %v1537 = vsel %vm1505, %v653, 128
      %v1538 = vsel %vm1506, %v654, 128
      %v1539 = vsel %vm1507, %v654, 128
      %v1540 = vsel %vm1508, %v655, 128
      %v1541 = vsel %vm1509, %v655, 128
      %v1542 = vsel %vm1510, %v656, 128
      %v1543 = vsel %vm1511, %v656, 128
      %v1544 = vsel %vm1512, %v657, 128
      %v1545 = vsel %vm1513, %v657, 128
      %v1546 = vsel %vm1514, %v658, 128
      %v1547 = vsel %vm1515, %v658, 128
      %v1548 = vsel %vm1516, %v659, 128
      %v1549 = vsel %vm1517, %v659, 128
      %v1550 = vsel %vm1518, %v660, 128
      %v1551 = vsel %vm1519, %v660, 128
      %v1552 = vsel %vm1520, %v661, 128
      %v1553 = vsel %vm1521, %v661, 128
      %v1554 = vsel %vm1522, %v662, 128
      %v1555 = vsel %vm1523, %v662, 128
      %v1556 = vsel %vm1524, %v663, 128
      %v1557 = vsel %vm1525, %v663, 128
      %v1558 = vsel %vm1526, %v664, 128
      %v1559 = vsel %vm1527, %v664, 128
      %v1560 = vsel %vm1528, %v665, 128
      %v1561 = vsel %vm1529, %v665, 128
      %v1562 = vsel %vm1530, %v666, 128
      %v1563 = vsel %vm1531, %v666, 128
      %v1564 = vsel %vm1532, %v667, 128
      %v1565 = vsel %vm1533, %v667, 128
      %vm1566 = vcmp.lt.s32.totalorder %v1534, %v1538
      %v1567 = vsel %vm1566, %v1534, %v1538
      %vm1568 = vcmp.lt.s32.totalorder %v1536, %v1540
      %v1569 = vsel %vm1568, %v1536, %v1540
      %vm1570 = vcmp.lt.s32.totalorder %v1567, %v1542
      %v1571 = vsel %vm1570, %v1567, %v1542
      %vm1572 = vcmp.lt.s32.totalorder %v1569, %v1544
      %v1573 = vsel %vm1572, %v1569, %v1544
      %vm1574 = vcmp.lt.s32.totalorder %v1571, %v1546
      %v1575 = vsel %vm1574, %v1571, %v1546
      %vm1576 = vcmp.lt.s32.totalorder %v1573, %v1548
      %v1577 = vsel %vm1576, %v1573, %v1548
      %vm1578 = vcmp.lt.s32.totalorder %v1575, %v1550
      %v1579 = vsel %vm1578, %v1575, %v1550
      %vm1580 = vcmp.lt.s32.totalorder %v1577, %v1552
      %v1581 = vsel %vm1580, %v1577, %v1552
      %vm1582 = vcmp.lt.s32.totalorder %v1579, %v1554
      %v1583 = vsel %vm1582, %v1579, %v1554
      %vm1584 = vcmp.lt.s32.totalorder %v1581, %v1556
      %v1585 = vsel %vm1584, %v1581, %v1556
      %vm1586 = vcmp.lt.s32.totalorder %v1583, %v1558
      %v1587 = vsel %vm1586, %v1583, %v1558
      %vm1588 = vcmp.lt.s32.totalorder %v1585, %v1560
      %v1589 = vsel %vm1588, %v1585, %v1560
      %vm1590 = vcmp.lt.s32.totalorder %v1587, %v1562
      %v1591 = vsel %vm1590, %v1587, %v1562
      %vm1592 = vcmp.lt.s32.totalorder %v1589, %v1564
      %v1593 = vsel %vm1592, %v1589, %v1564
      %vm1594 = vcmp.lt.s32.totalorder %v1591, %v1593
      %v1595 = vsel %vm1594, %v1591, %v1593
      %v1596 = vrot.slane %v1595, 4
      %vm1597 = vcmp.lt.s32.totalorder %v1595, %v1596
      %v1598 = vsel %vm1597, %v1595, %v1596
      %v1599 = vrot.slane %v1598, 2
      %vm1600 = vcmp.lt.s32.totalorder %v1598, %v1599
      %v1601 = vsel %vm1600, %v1598, %v1599
      %v1602 = vrot.slane %v1601, 1
      %vm1603 = vcmp.lt.s32.totalorder %v1601, %v1602
      %v1604 = vsel %vm1603, %v1601, %v1602
      %vm1605 = vcmp.lt.s32.totalorder %v1535, %v1539
      %v1606 = vsel %vm1605, %v1535, %v1539
      %vm1607 = vcmp.lt.s32.totalorder %v1537, %v1541
      %v1608 = vsel %vm1607, %v1537, %v1541
      %vm1609 = vcmp.lt.s32.totalorder %v1606, %v1543
      %v1610 = vsel %vm1609, %v1606, %v1543
      %vm1611 = vcmp.lt.s32.totalorder %v1608, %v1545
      %v1612 = vsel %vm1611, %v1608, %v1545
      %vm1613 = vcmp.lt.s32.totalorder %v1610, %v1547
      %v1614 = vsel %vm1613, %v1610, %v1547
      %vm1615 = vcmp.lt.s32.totalorder %v1612, %v1549
      %v1616 = vsel %vm1615, %v1612, %v1549
      %vm1617 = vcmp.lt.s32.totalorder %v1614, %v1551
      %v1618 = vsel %vm1617, %v1614, %v1551
      %vm1619 = vcmp.lt.s32.totalorder %v1616, %v1553
      %v1620 = vsel %vm1619, %v1616, %v1553
      %vm1621 = vcmp.lt.s32.totalorder %v1618, %v1555
      %v1622 = vsel %vm1621, %v1618, %v1555
      %vm1623 = vcmp.lt.s32.totalorder %v1620, %v1557
      %v1624 = vsel %vm1623, %v1620, %v1557
      %vm1625 = vcmp.lt.s32.totalorder %v1622, %v1559
      %v1626 = vsel %vm1625, %v1622, %v1559
      %vm1627 = vcmp.lt.s32.totalorder %v1624, %v1561
      %v1628 = vsel %vm1627, %v1624, %v1561
      %vm1629 = vcmp.lt.s32.totalorder %v1626, %v1563
      %v1630 = vsel %vm1629, %v1626, %v1563
      %vm1631 = vcmp.lt.s32.totalorder %v1628, %v1565
      %v1632 = vsel %vm1631, %v1628, %v1565
      %vm1633 = vcmp.lt.s32.totalorder %v1630, %v1632
      %v1634 = vsel %vm1633, %v1630, %v1632
      %v1635 = vrot.slane %v1634, 4
      %vm1636 = vcmp.lt.s32.totalorder %v1634, %v1635
      %v1637 = vsel %vm1636, %v1634, %v1635
      %v1638 = vrot.slane %v1637, 2
      %vm1639 = vcmp.lt.s32.totalorder %v1637, %v1638
      %v1640 = vsel %vm1639, %v1637, %v1638
      %v1641 = vrot.slane %v1640, 1
      %vm1642 = vcmp.lt.s32.totalorder %v1640, %v1641
      %v1643 = vsel %vm1642, %v1640, %v1641
      %vm1644 = vcmp.eq.s32.totalorder %v652, %v1604
      %vm1645 = vcmp.eq.s32.totalorder %v652, %v1643
      %vm1646 = vcmp.eq.s32.totalorder %v653, %v1604
      %vm1647 = vcmp.eq.s32.totalorder %v653, %v1643
      %vm1648 = vcmp.eq.s32.totalorder %v654, %v1604
      %vm1649 = vcmp.eq.s32.totalorder %v654, %v1643
      %vm1650 = vcmp.eq.s32.totalorder %v655, %v1604
      %vm1651 = vcmp.eq.s32.totalorder %v655, %v1643
      %vm1652 = vcmp.eq.s32.totalorder %v656, %v1604
      %vm1653 = vcmp.eq.s32.totalorder %v656, %v1643
      %vm1654 = vcmp.eq.s32.totalorder %v657, %v1604
      %vm1655 = vcmp.eq.s32.totalorder %v657, %v1643
      %vm1656 = vcmp.eq.s32.totalorder %v658, %v1604
      %vm1657 = vcmp.eq.s32.totalorder %v658, %v1643
      %vm1658 = vcmp.eq.s32.totalorder %v659, %v1604
      %vm1659 = vcmp.eq.s32.totalorder %v659, %v1643
      %vm1660 = vcmp.eq.s32.totalorder %v660, %v1604
      %vm1661 = vcmp.eq.s32.totalorder %v660, %v1643
      %vm1662 = vcmp.eq.s32.totalorder %v661, %v1604
      %vm1663 = vcmp.eq.s32.totalorder %v661, %v1643
      %vm1664 = vcmp.eq.s32.totalorder %v662, %v1604
      %vm1665 = vcmp.eq.s32.totalorder %v662, %v1643
      %vm1666 = vcmp.eq.s32.totalorder %v663, %v1604
      %vm1667 = vcmp.eq.s32.totalorder %v663, %v1643
      %vm1668 = vcmp.eq.s32.totalorder %v664, %v1604
      %vm1669 = vcmp.eq.s32.totalorder %v664, %v1643
      %vm1670 = vcmp.eq.s32.totalorder %v665, %v1604
      %vm1671 = vcmp.eq.s32.totalorder %v665, %v1643
      %vm1672 = vcmp.eq.s32.totalorder %v666, %v1604
      %vm1673 = vcmp.eq.s32.totalorder %v666, %v1643
      %vm1674 = vcmp.eq.s32.totalorder %v667, %v1604
      %vm1675 = vcmp.eq.s32.totalorder %v667, %v1643
      %v1676 = vsel %vm1644, 1, 0
      %v1677 = vsel %vm1645, 1, 0
      %v1678 = vsel %vm1646, 1, 0
      %v1679 = vsel %vm1647, 1, 0
      %v1680 = vsel %vm1648, 1, 0
      %v1681 = vsel %vm1649, 1, 0
      %v1682 = vsel %vm1650, 1, 0
      %v1683 = vsel %vm1651, 1, 0
      %v1684 = vsel %vm1652, 1, 0
      %v1685 = vsel %vm1653, 1, 0
      %v1686 = vsel %vm1654, 1, 0
      %v1687 = vsel %vm1655, 1, 0
      %v1688 = vsel %vm1656, 1, 0
      %v1689 = vsel %vm1657, 1, 0
      %v1690 = vsel %vm1658, 1, 0
      %v1691 = vsel %vm1659, 1, 0
      %v1692 = vsel %vm1660, 1, 0
      %v1693 = vsel %vm1661, 1, 0
      %v1694 = vsel %vm1662, 1, 0
      %v1695 = vsel %vm1663, 1, 0
      %v1696 = vsel %vm1664, 1, 0
      %v1697 = vsel %vm1665, 1, 0
      %v1698 = vsel %vm1666, 1, 0
      %v1699 = vsel %vm1667, 1, 0
      %v1700 = vsel %vm1668, 1, 0
      %v1701 = vsel %vm1669, 1, 0
      %v1702 = vsel %vm1670, 1, 0
      %v1703 = vsel %vm1671, 1, 0
      %v1704 = vsel %vm1672, 1, 0
      %v1705 = vsel %vm1673, 1, 0
      %v1706 = vsel %vm1674, 1, 0
      %v1707 = vsel %vm1675, 1, 0
      %v1708 = vcvt.s32.f32 %v1676
      %v1709 = vcvt.s32.f32 %v1677
      %v1710 = vcvt.s32.f32 %v1678
      %v1711 = vcvt.s32.f32 %v1679
      %v1712 = vcvt.s32.f32 %v1680
      %v1713 = vcvt.s32.f32 %v1681
      %v1714 = vcvt.s32.f32 %v1682
      %v1715 = vcvt.s32.f32 %v1683
      %v1716 = vcvt.s32.f32 %v1684
      %v1717 = vcvt.s32.f32 %v1685
      %v1718 = vcvt.s32.f32 %v1686
      %v1719 = vcvt.s32.f32 %v1687
      %v1720 = vcvt.s32.f32 %v1688
      %v1721 = vcvt.s32.f32 %v1689
      %v1722 = vcvt.s32.f32 %v1690
      %v1723 = vcvt.s32.f32 %v1691
      %v1724 = vcvt.s32.f32 %v1692
      %v1725 = vcvt.s32.f32 %v1693
      %v1726 = vcvt.s32.f32 %v1694
      %v1727 = vcvt.s32.f32 %v1695
      %v1728 = vcvt.s32.f32 %v1696
      %v1729 = vcvt.s32.f32 %v1697
      %v1730 = vcvt.s32.f32 %v1698
      %v1731 = vcvt.s32.f32 %v1699
      %v1732 = vcvt.s32.f32 %v1700
      %v1733 = vcvt.s32.f32 %v1701
      %v1734 = vcvt.s32.f32 %v1702
      %v1735 = vcvt.s32.f32 %v1703
      %v1736 = vcvt.s32.f32 %v1704
      %v1737 = vcvt.s32.f32 %v1705
      %v1738 = vcvt.s32.f32 %v1706
      %v1739 = vcvt.s32.f32 %v1707
      %v1740 = vld [vmem:[%s4] sm:$0xff]
      %v1741 = vld [vmem:[%s4 + $0x8] sm:$0xff]
      %v1742 = vld [vmem:[%s4 + $0x10] sm:$0xff]
      %v1743 = vld [vmem:[%s4 + $0x18] sm:$0xff]
      %1744 = vmatprep.subr.mxu0 %v1709
      %1745 = vmatpush1.msra.mxu0 %v1708
      %1746 = vmatprep.subr.mxu0 %v1711
      %1747 = vmatpush1.msra.mxu0 %v1710
      %1748 = vmatprep.subr.mxu0 %v1713
      %1749 = vmatpush1.msra.mxu0 %v1712
      %1750 = vmatprep.subr.mxu0 %v1715
      %1751 = vmatpush1.msra.mxu0 %v1714
      %1752 = vmatprep.subr.mxu0 %v1717
      %1753 = vmatpush1.msra.mxu0 %v1716
      %1754 = vmatprep.subr.mxu0 %v1719
      %1755 = vmatpush1.msra.mxu0 %v1718
      %1756 = vmatprep.subr.mxu0 %v1721
      %1757 = vmatpush1.msra.mxu0 %v1720
      %1758 = vmatprep.subr.mxu0 %v1723
      %1759 = vmatpush1.msra.mxu0 %v1722
      %1760 = vmatprep.subr.mxu0 %v1725
      %1761 = vmatpush1.msra.mxu0 %v1724
      %1762 = vmatprep.subr.mxu0 %v1727
      %1763 = vmatpush1.msra.mxu0 %v1726
      %1764 = vmatprep.subr.mxu0 %v1729
      %1765 = vmatpush1.msra.mxu0 %v1728
      %1766 = vmatprep.subr.mxu0 %v1731
      %1767 = vmatpush1.msra.mxu0 %v1730
      %1768 = vmatprep.subr.mxu0 %v1733
      %1769 = vmatpush1.msra.mxu0 %v1732
      %1770 = vmatprep.subr.mxu0 %v1735
      %1771 = vmatpush1.msra.mxu0 %v1734
      %1772 = vmatprep.subr.mxu0 %v1737
      %1773 = vmatpush1.msra.mxu0 %v1736
      %1774 = vmatprep.subr.mxu0 %v1739
      %1775 = vmatpush1.msra.mxu0 %v1738
      %1776 = vmatprep.subr.mxu0 0.0
      %1777 = vmatpush1.msra.mxu0 0.0
      %1778 = vmatprep.subr.mxu0 0.0
      %1779 = vmatpush1.msra.mxu0 0.0
      %1780 = vmatprep.subr.mxu0 0.0
      %1781 = vmatpush1.msra.mxu0 0.0
      %1782 = vmatprep.subr.mxu0 0.0
      %1783 = vmatpush1.msra.mxu0 0.0
      %1784 = vmatprep.subr.mxu0 0.0
      %1785 = vmatpush1.msra.mxu0 0.0
      %1786 = vmatprep.subr.mxu0 0.0
      %1787 = vmatpush1.msra.mxu0 0.0
      %1788 = vmatprep.subr.mxu0 0.0
      %1789 = vmatpush1.msra.mxu0 0.0
      %1790 = vmatprep.subr.mxu0 0.0
      %1791 = vmatpush1.msra.mxu0 0.0
      %1792 = vmatprep.subr.mxu0 0.0
      %1793 = vmatpush1.msra.mxu0 0.0
      %1794 = vmatprep.subr.mxu0 0.0
      %1795 = vmatpush1.msra.mxu0 0.0
      %1796 = vmatprep.subr.mxu0 0.0
      %1797 = vmatpush1.msra.mxu0 0.0
      %1798 = vmatprep.subr.mxu0 0.0
      %1799 = vmatpush1.msra.mxu0 0.0
      %1800 = vmatprep.subr.mxu0 0.0
      %1801 = vmatpush1.msra.mxu0 0.0
      %1802 = vmatprep.subr.mxu0 0.0
      %1803 = vmatpush1.msra.mxu0 0.0
      %1804 = vmatprep.subr.mxu0 0.0
      %1805 = vmatpush1.msra.mxu0 0.0
      %1806 = vmatprep.subr.mxu0 0.0
      %1807 = vmatpush1.msra.mxu0 0.0
      %1808 = vmatprep.mubr.f32.mxu0 0.0
      %1809 = vmatmul.mubr.f32.gmra.mrb[0].mxu0 %v1740
      %v1810 = vpop.f32.mrb[0].mxu0
      %v1811 = vadd.f32 0.0, %v1810
      %v1812 = vpop.f32.mrb[0].mxu0
      %v1813 = vadd.f32 0.0, %v1812
      %1814 = vmatprep.mubr.f32.mxu0 0.0
      %1815 = vmatmul.mubr.f32.gmra.mrb[0].mxu0 %v1741
      %v1816 = vpop.f32.mrb[0].mxu0
      %v1817 = vadd.f32 0.0, %v1816
      %v1818 = vpop.f32.mrb[0].mxu0
      %v1819 = vadd.f32 0.0, %v1818
      %1820 = vmatprep.mubr.f32.mxu0 0.0
      %1821 = vmatmul.mubr.f32.gmra.mrb[0].mxu0 %v1742
      %v1822 = vpop.f32.mrb[0].mxu0
      %v1823 = vadd.f32 0.0, %v1822
      %v1824 = vpop.f32.mrb[0].mxu0
      %v1825 = vadd.f32 0.0, %v1824
      %1826 = vmatprep.mubr.f32.mxu0 0.0
      %1827 = vmatmul.mubr.f32.gmra.mrb[0].mxu0 %v1743
      %v1828 = vpop.f32.mrb[0].mxu0
      %v1829 = vadd.f32 0.0, %v1828
      %v1830 = vpop.f32.mrb[0].mxu0
      %v1831 = vadd.f32 0.0, %v1830
      %1832 = vdwg.mxu0
      %1833 = vst [vmem:[%s316] sm:$0xff] %v1811
      %1834 = vst [vmem:[%s316 + $0x8] sm:$0xff] %v1813
      %1835 = vst [vmem:[%s316 + $0x10] sm:$0xff] %v1817
      %1836 = vst [vmem:[%s316 + $0x18] sm:$0xff] %v1819
      %1837 = vst [vmem:[%s316 + $0x20] sm:$0xff] %v1823
      %1838 = vst [vmem:[%s316 + $0x28] sm:$0xff] %v1825
      %1839 = vst [vmem:[%s316 + $0x30] sm:$0xff] %v1829
      %1840 = vst [vmem:[%s316 + $0x38] sm:$0xff] %v1831
      %v1841 = vcombine.low %v1604, %v1643
      %v1843 = vunpack.c.l.s4 1966171168
      %v1844 = vunpack.c.0.s8 %v1843
      %v1845 = vlaneseq
      %v1846 = vshrl.u32 %v1845, 7
      %v1847 = vsub.s32 %v1844, %v1846
      %v1848 = vrot.slane %v1841, %v1847
      %v1850 = vunpack.c.l.s4 1966171168
      %v1851 = vunpack.c.0.s8 %v1850
      %v1852 = vlaneseq
      %v1853 = vshrl.u32 %v1852, 7
      %v1854 = vsub.s32 %v1851, %v1853
      %v1855 = vrot.slane %v1848, %v1854
      %v1856 = vlaneseq
      %vm1857 = vcmp.ge.s32.totalorder %v1856, 0
      %vm1858 = vcmp.lt.s32.totalorder %v1856, 256
      %vm1859 = vmand %vm1857, %vm1858
      %1860 = vst.msk [vmem:[%s325] sm:$0x3] %vm1859, %v1855
      %v1861 = vadd.f32 %v746, %v750
      %v1862 = vadd.f32 %v1861, %v754
      %v1863 = vadd.f32 %v1862, %v758
      %v1864 = vadd.f32 %v1863, %v762
      %v1865 = vadd.f32 %v1864, %v766
      %v1866 = vadd.f32 %v1865, %v770
      %v1867 = vadd.f32 %v1866, %v774
      %v1868 = vadd.f32 %v1867, %v778
      %v1869 = vadd.f32 %v1868, %v782
      %v1870 = vadd.f32 %v1869, %v786
      %v1871 = vadd.f32 %v1870, %v790
      %v1872 = vadd.f32 %v1871, %v794
      %v1873 = vadd.f32 %v1872, %v798
      %v1874 = vadd.f32 %v1873, %v802
      %v1875 = vadd.f32 %v1874, %v806
      %v1876 = vrot.slane %v1875, 4
      %v1877 = vadd.f32 %v1875, %v1876
      %v1878 = vrot.slane %v1877, 2
      %v1879 = vadd.f32 %v1877, %v1878
      %v1880 = vrot.slane %v1879, 1
      %v1881 = vadd.f32 %v1879, %v1880
      %v1882 = vadd.f32 %v748, %v752
      %v1883 = vadd.f32 %v1882, %v756
      %v1884 = vadd.f32 %v1883, %v760
      %v1885 = vadd.f32 %v1884, %v764
      %v1886 = vadd.f32 %v1885, %v768
      %v1887 = vadd.f32 %v1886, %v772
      %v1888 = vadd.f32 %v1887, %v776
      %v1889 = vadd.f32 %v1888, %v780
      %v1890 = vadd.f32 %v1889, %v784
      %v1891 = vadd.f32 %v1890, %v788
      %v1892 = vadd.f32 %v1891, %v792
      %v1893 = vadd.f32 %v1892, %v796
      %v1894 = vadd.f32 %v1893, %v800
      %v1895 = vadd.f32 %v1894, %v804
      %v1896 = vadd.f32 %v1895, %v808
      %v1897 = vrot.slane %v1896, 4
      %v1898 = vadd.f32 %v1896, %v1897
      %v1899 = vrot.slane %v1898, 2
      %v1900 = vadd.f32 %v1898, %v1899
      %v1901 = vrot.slane %v1900, 1
      %v1902 = vadd.f32 %v1900, %v1901
      %v1903 = vmul.f32 %v746, %v713
      %v1904 = vmul.f32 %v748, %v714
      %v1905 = vmul.f32 %v750, %v715
      %v1906 = vmul.f32 %v752, %v716
      %v1907 = vmul.f32 %v754, %v717
      %v1908 = vmul.f32 %v756, %v718
      %v1909 = vmul.f32 %v758, %v719
      %v1910 = vmul.f32 %v760, %v720
      %v1911 = vmul.f32 %v762, %v721
      %v1912 = vmul.f32 %v764, %v722
      %v1913 = vmul.f32 %v766, %v723
      %v1914 = vmul.f32 %v768, %v724
      %v1915 = vmul.f32 %v770, %v725
      %v1916 = vmul.f32 %v772, %v726
      %v1917 = vmul.f32 %v774, %v727
      %v1918 = vmul.f32 %v776, %v728
      %v1919 = vmul.f32 %v778, %v729
      %v1920 = vmul.f32 %v780, %v730
      %v1921 = vmul.f32 %v782, %v731
      %v1922 = vmul.f32 %v784, %v732
      %v1923 = vmul.f32 %v786, %v733
      %v1924 = vmul.f32 %v788, %v734
      %v1925 = vmul.f32 %v790, %v735
      %v1926 = vmul.f32 %v792, %v736
      %v1927 = vmul.f32 %v794, %v737
      %v1928 = vmul.f32 %v796, %v738
      %v1929 = vmul.f32 %v798, %v739
      %v1930 = vmul.f32 %v800, %v740
      %v1931 = vmul.f32 %v802, %v741
      %v1932 = vmul.f32 %v804, %v742
      %v1933 = vmul.f32 %v806, %v743
      %v1934 = vmul.f32 %v808, %v744
      %v1935 = vadd.f32 %v1903, %v1905
      %v1936 = vadd.f32 %v1935, %v1907
      %v1937 = vadd.f32 %v1936, %v1909
      %v1938 = vadd.f32 %v1937, %v1911
      %v1939 = vadd.f32 %v1938, %v1913
      %v1940 = vadd.f32 %v1939, %v1915
      %v1941 = vadd.f32 %v1940, %v1917
      %v1942 = vadd.f32 %v1941, %v1919
      %v1943 = vadd.f32 %v1942, %v1921
      %v1944 = vadd.f32 %v1943, %v1923
      %v1945 = vadd.f32 %v1944, %v1925
      %v1946 = vadd.f32 %v1945, %v1927
      %v1947 = vadd.f32 %v1946, %v1929
      %v1948 = vadd.f32 %v1947, %v1931
      %v1949 = vadd.f32 %v1948, %v1933
      %v1950 = vrot.slane %v1949, 4
      %v1951 = vadd.f32 %v1949, %v1950
      %v1952 = vrot.slane %v1951, 2
      %v1953 = vadd.f32 %v1951, %v1952
      %v1954 = vrot.slane %v1953, 1
      %v1955 = vadd.f32 %v1953, %v1954
      %v1956 = vadd.f32 %v1904, %v1906
      %v1957 = vadd.f32 %v1956, %v1908
      %v1958 = vadd.f32 %v1957, %v1910
      %v1959 = vadd.f32 %v1958, %v1912
      %v1960 = vadd.f32 %v1959, %v1914
      %v1961 = vadd.f32 %v1960, %v1916
      %v1962 = vadd.f32 %v1961, %v1918
      %v1963 = vadd.f32 %v1962, %v1920
      %v1964 = vadd.f32 %v1963, %v1922
      %v1965 = vadd.f32 %v1964, %v1924
      %v1966 = vadd.f32 %v1965, %v1926
      %v1967 = vadd.f32 %v1966, %v1928
      %v1968 = vadd.f32 %v1967, %v1930
      %v1969 = vadd.f32 %v1968, %v1932
      %v1970 = vadd.f32 %v1969, %v1934
      %v1971 = vrot.slane %v1970, 4
      %v1972 = vadd.f32 %v1970, %v1971
      %v1973 = vrot.slane %v1972, 2
      %v1974 = vadd.f32 %v1972, %v1973
      %v1975 = vrot.slane %v1974, 1
      %v1976 = vadd.f32 %v1974, %v1975
      %v1977 = vrcp.pop %v1881
      %v1978 = vmul.f32 %v1955, %v1977
      %v1979 = vrcp.pop %v1902
      %v1980 = vmul.f32 %v1976, %v1979
      %v1981 = vlog2.pop %v1881
      %v1982 = vmul.f32 %v1981, 0.6931472
      %v1983 = vlog2.pop %v1902
      %v1984 = vmul.f32 %v1983, 0.6931472
      %v1985 = vsub.f32 %v1978, %v1982
      %v1986 = vsub.f32 %v1980, %v1984
      %v1987 = vadd.f32 %v1985, 4.8520303
      %v1988 = vadd.f32 %v1986, 4.8520303
      %v1991 = vcombine.low %v1987, %v1988
      %v1993 = vunpack.c.l.s4 1966171168
      %v1994 = vunpack.c.0.s8 %v1993
      %v1995 = vlaneseq
      %v1996 = vshrl.u32 %v1995, 7
      %v1997 = vsub.s32 %v1994, %v1996
      %v1998 = vrot.slane %v1991, %v1997
      %v2000 = vunpack.c.l.s4 1966171168
      %v2001 = vunpack.c.0.s8 %v2000
      %v2002 = vlaneseq
      %v2003 = vshrl.u32 %v2002, 7
      %v2004 = vsub.s32 %v2001, %v2003
      %v2005 = vrot.slane %v1998, %v2004
      %2007 = vst.msk [vmem:[%s334] sm:$0x3] %vm1859, %v2005
      %s2008 = smul.u32 2, %s25
      %p2009 = scmp.lt.s32.totalorder %s24, 1
      %s2010 = scalar_select %p2009, %s24, 1
      %p2011 = scmp.lt.s32.totalorder %s2008, 1
      %s2012 = scalar_select %p2011, %s2008, 1
      %s2013 = smul.addr %s2010, 8
      %s2014 = sadd.s32 %s2012, %s2013
      %s2015 = smul.addr %s2014, 8
      %s2016 = scalar_lea.vmem %s5, %s2015
      %s2017 = smul.u32 2, %s25
      %p2018 = scmp.lt.s32.totalorder %s24, 1
      %s2019 = scalar_select %p2018, %s24, 1
      %p2020 = scmp.lt.s32.totalorder %s2017, 1
      %s2021 = scalar_select %p2020, %s2017, 1
      %s2022 = smul.addr %s2019, 2
      %s2023 = sadd.s32 %s2021, %s2022
      %s2024 = scalar_lea.vmem %s6, %s2023
      %s2025 = smul.u32 2, %s25
      %p2026 = scmp.lt.s32.totalorder %s24, 1
      %s2027 = scalar_select %p2026, %s24, 1
      %p2028 = scmp.lt.s32.totalorder %s2025, 1
      %s2029 = scalar_select %p2028, %s2025, 1
      %s2030 = smul.addr %s2027, 2
      %s2031 = sadd.s32 %s2029, %s2030
      %s2032 = scalar_lea.vmem %s7, %s2031
      // Predicated region
      $region37: #{gumbel_quantizer_forward.1} parent=35 // pred_check
        %p2033 = pneg %p143
      $region38: #{gumbel_quantizer_forward.1} parent=35 // pred_check_branch
        %2035 = sbr.rel (%p2033) target = $region40
      $region39: #{gumbel_quantizer_forward.1} parent=35 // pred_region
        %s2036 = smul.u32 2, %s25
      $region40: #{gumbel_quantizer_forward.1} parent=35 // pred_fallthru
        _
      // Predicated region
      $region41: #{gumbel_quantizer_forward.1} parent=35 // pred_check
        %p2037 = pneg %p171
      $region42: #{gumbel_quantizer_forward.1} parent=35 // pred_check_branch
        %2039 = sbr.rel (%p2037) target = $region44
      $region43: #{gumbel_quantizer_forward.1} parent=35 // pred_region
        %s2040 = smul.u32 2, %s25
      $region44: #{gumbel_quantizer_forward.1} parent=35 // pred_fallthru
        _
      // Predicated region
      $region45: #{gumbel_quantizer_forward.1} parent=35 // pred_check
        %p2041 = pneg %p199
      $region46: #{gumbel_quantizer_forward.1} parent=35 // pred_check_branch
        %2043 = sbr.rel (%p2041) target = $region48
      $region47: #{gumbel_quantizer_forward.1} parent=35 // pred_region
        %s2044 = smul.u32 2, %s25
      $region48: #{gumbel_quantizer_forward.1} parent=35 // pred_fallthru
        _
    $region36: #{gumbel_quantizer_forward.1} parent=5 // pred_fallthru
      _
    %p2045 = scmp.le.s32.totalorder 2, %s15
    // Predicated region
    $region49: #{gumbel_quantizer_forward.1} parent=5 // pred_check
      %p2046 = pneg %p2045
    $region50: #{gumbel_quantizer_forward.1} parent=5 // pred_check_branch
      %2048 = sbr.rel (%p2046) target = $region52
    $region51: #{gumbel_quantizer_forward.1} parent=5 // pred_region
      %s2049 = ssub.s32 %s15, 2
      // Predicated region
      $region53: #{gumbel_quantizer_forward.1} parent=51 // pred_check
        %p2050 = pneg %p149
      $region54: #{gumbel_quantizer_forward.1} parent=51 // pred_check_branch
        %2052 = sbr.rel (%p2050) target = $region56
      $region55: #{gumbel_quantizer_forward.1} parent=51 // pred_region
        %s2053 = smul.u32 2, %s27
        %p2054 = scmp.lt.s32.totalorder %s26, 1
        %s2055 = scalar_select %p2054, %s26, 1
        %p2056 = scmp.lt.s32.totalorder %s2053, 1
        %s2057 = scalar_select %p2056, %s2053, 1
        %s2058 = smul.addr %s2055, 8
        %s2059 = sadd.s32 %s2057, %s2058
        %s2060 = smul.addr %s2059, 8
        %s2061 = scalar_lea.vmem %s5, %s2060
      $region56: #{gumbel_quantizer_forward.1} parent=51 // pred_fallthru
        _
      // Predicated region
      $region57: #{gumbel_quantizer_forward.1} parent=51 // pred_check
        %p2062 = pneg %p177
      $region58: #{gumbel_quantizer_forward.1} parent=51 // pred_check_branch
        %2064 = sbr.rel (%p2062) target = $region60
      $region59: #{gumbel_quantizer_forward.1} parent=51 // pred_region
        %s2065 = smul.u32 2, %s27
        %p2066 = scmp.lt.s32.totalorder %s26, 1
        %s2067 = scalar_select %p2066, %s26, 1
        %p2068 = scmp.lt.s32.totalorder %s2065, 1
        %s2069 = scalar_select %p2068, %s2065, 1
        %s2070 = smul.addr %s2067, 2
        %s2071 = sadd.s32 %s2069, %s2070
        %s2072 = scalar_lea.vmem %s6, %s2071
      $region60: #{gumbel_quantizer_forward.1} parent=51 // pred_fallthru
        _
      // Predicated region
      $region61: #{gumbel_quantizer_forward.1} parent=51 // pred_check
        %p2073 = pneg %p205
      $region62: #{gumbel_quantizer_forward.1} parent=51 // pred_check_branch
        %2075 = sbr.rel (%p2073) target = $region64
      $region63: #{gumbel_quantizer_forward.1} parent=51 // pred_region
        %s2076 = smul.u32 2, %s27
        %p2077 = scmp.lt.s32.totalorder %s26, 1
        %s2078 = scalar_select %p2077, %s26, 1
        %p2079 = scmp.lt.s32.totalorder %s2076, 1
        %s2080 = scalar_select %p2079, %s2076, 1
        %s2081 = smul.addr %s2078, 2
        %s2082 = sadd.s32 %s2080, %s2081
        %s2083 = scalar_lea.vmem %s7, %s2082
      $region64: #{gumbel_quantizer_forward.1} parent=51 // pred_fallthru
        _
    $region52: #{gumbel_quantizer_forward.1} parent=5 // pred_fallthru
      _
  $region6: #{gumbel_quantizer_forward.1} parent=0 // loop_footer
    %s19 = sadd.s32 1, %s15
  $region7: #{gumbel_quantizer_forward.1} parent=0 // loop_footer_branch
    %14 = sbr.rel target = $region3
  $region8: #{gumbel_quantizer_forward.1} parent=0 // loop_exit
    _

</llo_original>
